<compile_context>
chip_gen: v7x
topology: tpu7x:2x2x1
jax: 0.10.0
libtpu: 0.0.40
codegen_flags: <defaults>
</compile_context>

<pallas_src>
import functools

import numpy as np
import jax
import jax.numpy as jnp
from jax import lax
from jax.experimental import pallas as pl
from jax.experimental.pallas import tpu as pltpu

_LANE = 128


def _win_bounds(out_size, in_size):
    """PyTorch adaptive pooling window [start, end) per output index (static ints)."""
    return [((o * in_size) // out_size, -((-(o + 1) * in_size) // out_size))
            for o in range(out_size)]


def adaptive_pool_kernel(x_ref, o0_ref, i0_ref, o1_ref, o2_ref, o3_ref, i3_ref, *, H, W):
    x = x_ref[...]                                            # (H, W, Cb): channels on lanes
    Cb = x.shape[-1]
    BIG = jnp.int32(H * W)
    w_iota = lax.broadcasted_iota(jnp.int32, (W, Cb), 0)      # value = w, per lane

    # ---- pool_0: (7, 6), return_indices --------------------------------------
    # Stage 1: reduce each of the 7 H-windows (leading-axis -> pure VPU maxes).
    yh_parts, hidx_parts = [], []
    for hs, he in _win_bounds(7, H):
        win = x[hs:he]                                        # (len, W, Cb)
        m = jnp.max(win, axis=0)                              # (W, Cb)
        hiota = lax.broadcasted_iota(jnp.int32, win.shape, 0) + hs
        hidx = jnp.min(jnp.where(win == m[None], hiota, BIG), axis=0)  # first h hitting col max
        yh_parts.append(m)
        hidx_parts.append(hidx)
    yh = jnp.stack(yh_parts, axis=0)                          # (7, W, Cb)
    hidx = jnp.stack(hidx_parts, axis=0)                      # (7, W, Cb)
    flat = hidx * W + w_iota[None]                            # flat index h*W + w

    # Stage 2: reduce each of the 6 W-windows (2-3 sublanes each).
    o0_parts, i0_parts = [], []
    for ws, we in _win_bounds(6, W):
        sub = yh[:, ws:we, :]                                 # (7, len, Cb)
        v = jnp.max(sub, axis=1)                              # (7, Cb)
        cand = jnp.where(sub == v[:, None, :], flat[:, ws:we, :], BIG)
        o0_parts.append(v)
        i0_parts.append(jnp.min(cand, axis=1))                # row-major-first tie break
    o0 = jnp.stack(o0_parts, axis=0)                          # (6, 7, Cb): axes (ow, oh, c)
    i0 = jnp.stack(i0_parts, axis=0)
    o0_ref[...] = o0
    i0_ref[...] = i0

    # ---- pool_1: global max; reuse pool_0 (its windows cover the whole plane) -
    o1_ref[...] = jnp.max(jnp.max(o0, axis=0), axis=0, keepdims=True)[None]   # (1, 1, Cb)

    # ---- pool_2: (None, 3) -> reduce over W only ------------------------------
    o2_ref[...] = jnp.stack(
        [jnp.max(x[:, ws:we, :], axis=1) for ws, we in _win_bounds(3, W)],
        axis=0)                                               # (3, H, Cb): axes (ow, h, c)

    # ---- pool_3: (2, None), return_indices -> reduce over H only --------------
    o3_parts, i3_parts = [], []
    for hs, he in _win_bounds(2, H):
        win = x[hs:he]                                        # (len, W, Cb)
        m = jnp.max(win, axis=0)                              # (W, Cb)
        hiota = lax.broadcasted_iota(jnp.int32, win.shape, 0) + hs
        hmin = jnp.min(jnp.where(win == m[None], hiota, BIG), axis=0)
        o3_parts.append(m)
        i3_parts.append(hmin * W + w_iota)
    o3_ref[...] = jnp.stack(o3_parts, axis=0)                 # (2, W, Cb): axes (oh, w, c)
    i3_ref[...] = jnp.stack(i3_parts, axis=0)


def model_forward(x):
    """Pallas implementation of Model.forward.

    TODO(synk): PyTorch returns int64 indices; int32 is emitted here (valid while H*W < 2^31).
    """
    N, C, H, W = x.shape
    NC = N * C
    NCp = ((NC + _LANE - 1) // _LANE) * _LANE                 # pad channels to lane width

    # Channel block: multiple of 128, input block kept to a few MiB (double-buffered
    # it stays far under the 32 MiB scoped VMEM default, incl. v7x); allow >=2 grid
    # steps when possible so both v7x TensorCores get work.
    bytes_per_chan = H * W * x.dtype.itemsize
    cb_max = max(_LANE, ((4 * 1024 * 1024) // bytes_per_chan) // _LANE * _LANE)
    if NCp >= 2 * _LANE:
        cb_max = min(cb_max, (NCp // 2) // _LANE * _LANE)
    Cb = min(cb_max, NCp)
    while NCp % Cb:
        Cb -= _LANE

    # Re-layout: (N, C, H, W) -> (H, W, NC) with channels on lanes; pad lanes.
    xt = jnp.transpose(x.reshape(NC, H, W), (1, 2, 0))
    if NCp != NC:
        xt = jnp.pad(xt, ((0, 0), (0, 0), (0, NCp - NC)))

    def spec(a, b):
        return pl.BlockSpec((a, b, Cb), lambda g: (0, 0, g))

    out_shape = (
        jax.ShapeDtypeStruct((6, 7, NCp), x.dtype),           # out0   (ow, oh, c)
        jax.ShapeDtypeStruct((6, 7, NCp), jnp.int32),         # idx0
        jax.ShapeDtypeStruct((1, 1, NCp), x.dtype),           # out1
        jax.ShapeDtypeStruct((3, H, NCp), x.dtype),           # out2   (ow, h, c)
        jax.ShapeDtypeStruct((2, W, NCp), x.dtype),           # out3   (oh, w, c)
        jax.ShapeDtypeStruct((2, W, NCp), jnp.int32),         # idx3
    )

    o0k, i0k, o1k, o2k, o3k, i3k = pl.pallas_call(
        functools.partial(adaptive_pool_kernel, H=H, W=W),
        out_shape=out_shape,
        grid=(NCp // Cb,),
        in_specs=[spec(H, W)],
        out_specs=(spec(6, 7), spec(6, 7), spec(1, 1), spec(3, H), spec(2, W), spec(2, W)),
        compiler_params=pltpu.CompilerParams(dimension_semantics=("parallel",)),
    )(xt)

    def back_ow_oh(a, oh, ow):     # kernel layout (ow, oh, c) -> (N, C, oh, ow)
        return jnp.transpose(a[:, :, :NC], (2, 1, 0)).reshape(N, C, oh, ow)

    def back_oh_ow(a, oh, ow):     # kernel layout (oh, ow, c) -> (N, C, oh, ow)
        return jnp.transpose(a[:, :, :NC], (2, 0, 1)).reshape(N, C, oh, ow)

    out0 = back_ow_oh(o0k, 7, 6)
    idx0 = back_ow_oh(i0k, 7, 6)
    out1 = o1k[0, 0, :NC].reshape(N, C, 1, 1)
    out2 = back_ow_oh(o2k, H, 3)
    out3 = back_oh_ow(o3k, 2, W)
    idx3 = back_oh_ow(i3k, 2, W)
    return out0, idx0, out1, out2, out3, idx3


def _ref_adaptive_max_pool(x_np, out_h, out_w):
    """Pure-numpy reference (PyTorch AdaptiveMaxPool2d semantics)."""
    N, C, H, W = x_np.shape
    out = np.empty((N, C, out_h, out_w), dtype=x_np.dtype)
    idx = np.empty((N, C, out_h, out_w), dtype=np.int32)
    for oh in range(out_h):
        hs, he = (oh * H) // out_h, -((-(oh + 1) * H) // out_h)
        for ow in range(out_w):
            ws, we = (ow * W) // out_w, -((-(ow + 1) * W) // out_w)
            win = x_np[:, :, hs:he, ws:we]
            flat = win.reshape(N, C, -1)
            am = np.argmax(flat, axis=-1)
            out[:, :, oh, ow] = np.max(flat, axis=-1)
            wh = am // (we - ws) + hs
            ww = am % (we - ws) + ws
            idx[:, :, oh, ow] = (wh * W + ww).astype(np.int32)
    return out, idx


if __name__ == "__main__":
    key = jax.random.PRNGKey(0)
    N, C, H, W = 2, 4, 16, 16
    x = jax.random.normal(key, (N, C, H, W), dtype=jnp.float32)

    outs = jax.block_until_ready(model_forward(x))
    out0, idx0, out1, out2, out3, idx3 = [np.asarray(o) for o in outs]

    # Verify against a numpy reference of PyTorch semantics.
    x_np = np.asarray(x)
    r0, ri0 = _ref_adaptive_max_pool(x_np, 7, 6)
    r1, _ = _ref_adaptive_max_pool(x_np, 1, 1)
    r2, _ = _ref_adaptive_max_pool(x_np, H, 3)
    r3, ri3 = _ref_adaptive_max_pool(x_np, 2, W)

    assert np.allclose(out0, r0) and np.array_equal(idx0, ri0)
    assert np.allclose(out1, r1)
    assert np.allclose(out2, r2)
    assert np.allclose(out3, r3) and np.array_equal(idx3, ri3)

    print("KERNEL_OK")
</pallas_src>

<mosaic_0001>
module attributes {stable_mosaic.version = 11 : i64} {
  func.func @adaptive_pool_kernel(%arg0: i32, %arg1: memref<16x16x128xf32, #tpu.memory_space<vmem>>, %arg2: memref<6x7x128xf32, #tpu.memory_space<vmem>>, %arg3: memref<6x7x128xi32, #tpu.memory_space<vmem>>, %arg4: memref<1x1x128xf32, #tpu.memory_space<vmem>>, %arg5: memref<3x16x128xf32, #tpu.memory_space<vmem>>, %arg6: memref<2x16x128xf32, #tpu.memory_space<vmem>>, %arg7: memref<2x16x128xi32, #tpu.memory_space<vmem>>) attributes {dimension_semantics = [#tpu.dimension_semantics<parallel>], iteration_bounds = array<i64: 1>, scalar_prefetch = 0 : i64, scratch_operands = 0 : i64, tpu.core_type = #tpu.core_type<tc>, window_params = [{transform_indices = @transform_0, window_bounds = array<i64: 16, 16, 128>}, {transform_indices = @transform_1, window_bounds = array<i64: 6, 7, 128>}, {transform_indices = @transform_2, window_bounds = array<i64: 6, 7, 128>}, {transform_indices = @transform_3, window_bounds = array<i64: 1, 1, 128>}, {transform_indices = @transform_4, window_bounds = array<i64: 3, 16, 128>}, {transform_indices = @transform_5, window_bounds = array<i64: 2, 16, 128>}, {transform_indices = @transform_6, window_bounds = array<i64: 2, 16, 128>}]} {
    %c0 = arith.constant 0 : index
    %c0_0 = arith.constant 0 : index
    %c0_1 = arith.constant 0 : index
    %0 = vector.load %arg1[%c0, %c0_0, %c0_1] : memref<16x16x128xf32, #tpu.memory_space<vmem>>, vector<16x16x128xf32>
    %1 = tpu.iota {dimensions = array<i32: 0>} : vector<16x128xi32>
    %2 = vector.extract_strided_slice %0 {offsets = [0, 0, 0], sizes = [3, 16, 128], strides = [1, 1, 1]} : vector<16x16x128xf32> to vector<3x16x128xf32>
    %cst = arith.constant dense<0xFF800000> : vector<16x128xf32>
    %3 = vector.multi_reduction <maximumf>, %2, %cst [0] : vector<3x16x128xf32> to vector<16x128xf32>
    %4 = tpu.iota {dimensions = array<i32: 0>} : vector<3x16x128xi32>
    %c0_i32 = arith.constant 0 : i32
    %5 = vector.broadcast %c0_i32 : i32 to vector<3x16x128xi32>
    %6 = arith.addi %4, %5 : vector<3x16x128xi32>
    %7 = vector.shape_cast %3 : vector<16x128xf32> to vector<1x16x128xf32>
    %8 = vector.broadcast %7 : vector<1x16x128xf32> to vector<3x16x128xf32>
    %9 = arith.cmpf oeq, %2, %8 : vector<3x16x128xf32>
    %c256_i32 = arith.constant 256 : i32
    %10 = vector.broadcast %c256_i32 : i32 to vector<3x16x128xi32>
    %11 = arith.select %9, %6, %10 : vector<3x16x128xi1>, vector<3x16x128xi32>
    %cst_2 = arith.constant dense<2147483647> : vector<16x128xi32>
    %12 = vector.multi_reduction <minsi>, %11, %cst_2 [0] : vector<3x16x128xi32> to vector<16x128xi32>
    %13 = vector.extract_strided_slice %0 {offsets = [2, 0, 0], sizes = [3, 16, 128], strides = [1, 1, 1]} : vector<16x16x128xf32> to vector<3x16x128xf32>
    %cst_3 = arith.constant dense<0xFF800000> : vector<16x128xf32>
    %14 = vector.multi_reduction <maximumf>, %13, %cst_3 [0] : vector<3x16x128xf32> to vector<16x128xf32>
    %15 = tpu.iota {dimensions = array<i32: 0>} : vector<3x16x128xi32>
    %c2_i32 = arith.constant 2 : i32
    %16 = vector.broadcast %c2_i32 : i32 to vector<3x16x128xi32>
    %17 = arith.addi %15, %16 : vector<3x16x128xi32>
    %18 = vector.shape_cast %14 : vector<16x128xf32> to vector<1x16x128xf32>
    %19 = vector.broadcast %18 : vector<1x16x128xf32> to vector<3x16x128xf32>
    %20 = arith.cmpf oeq, %13, %19 : vector<3x16x128xf32>
    %c256_i32_4 = arith.constant 256 : i32
    %21 = vector.broadcast %c256_i32_4 : i32 to vector<3x16x128xi32>
    %22 = arith.select %20, %17, %21 : vector<3x16x128xi1>, vector<3x16x128xi32>
    %cst_5 = arith.constant dense<2147483647> : vector<16x128xi32>
    %23 = vector.multi_reduction <minsi>, %22, %cst_5 [0] : vector<3x16x128xi32> to vector<16x128xi32>
    %24 = vector.extract_strided_slice %0 {offsets = [4, 0, 0], sizes = [3, 16, 128], strides = [1, 1, 1]} : vector<16x16x128xf32> to vector<3x16x128xf32>
    %cst_6 = arith.constant dense<0xFF800000> : vector<16x128xf32>
    %25 = vector.multi_reduction <maximumf>, %24, %cst_6 [0] : vector<3x16x128xf32> to vector<16x128xf32>
    %26 = tpu.iota {dimensions = array<i32: 0>} : vector<3x16x128xi32>
    %c4_i32 = arith.constant 4 : i32
    %27 = vector.broadcast %c4_i32 : i32 to vector<3x16x128xi32>
    %28 = arith.addi %26, %27 : vector<3x16x128xi32>
    %29 = vector.shape_cast %25 : vector<16x128xf32> to vector<1x16x128xf32>
    %30 = vector.broadcast %29 : vector<1x16x128xf32> to vector<3x16x128xf32>
    %31 = arith.cmpf oeq, %24, %30 : vector<3x16x128xf32>
    %c256_i32_7 = arith.constant 256 : i32
    %32 = vector.broadcast %c256_i32_7 : i32 to vector<3x16x128xi32>
    %33 = arith.select %31, %28, %32 : vector<3x16x128xi1>, vector<3x16x128xi32>
    %cst_8 = arith.constant dense<2147483647> : vector<16x128xi32>
    %34 = vector.multi_reduction <minsi>, %33, %cst_8 [0] : vector<3x16x128xi32> to vector<16x128xi32>
    %35 = vector.extract_strided_slice %0 {offsets = [6, 0, 0], sizes = [4, 16, 128], strides = [1, 1, 1]} : vector<16x16x128xf32> to vector<4x16x128xf32>
    %cst_9 = arith.constant dense<0xFF800000> : vector<16x128xf32>
    %36 = vector.multi_reduction <maximumf>, %35, %cst_9 [0] : vector<4x16x128xf32> to vector<16x128xf32>
    %37 = tpu.iota {dimensions = array<i32: 0>} : vector<4x16x128xi32>
    %c6_i32 = arith.constant 6 : i32
    %38 = vector.broadcast %c6_i32 : i32 to vector<4x16x128xi32>
    %39 = arith.addi %37, %38 : vector<4x16x128xi32>
    %40 = vector.shape_cast %36 : vector<16x128xf32> to vector<1x16x128xf32>
    %41 = vector.broadcast %40 : vector<1x16x128xf32> to vector<4x16x128xf32>
    %42 = arith.cmpf oeq, %35, %41 : vector<4x16x128xf32>
    %c256_i32_10 = arith.constant 256 : i32
    %43 = vector.broadcast %c256_i32_10 : i32 to vector<4x16x128xi32>
    %44 = arith.select %42, %39, %43 : vector<4x16x128xi1>, vector<4x16x128xi32>
    %cst_11 = arith.constant dense<2147483647> : vector<16x128xi32>
    %45 = vector.multi_reduction <minsi>, %44, %cst_11 [0] : vector<4x16x128xi32> to vector<16x128xi32>
    %46 = vector.extract_strided_slice %0 {offsets = [9, 0, 0], sizes = [3, 16, 128], strides = [1, 1, 1]} : vector<16x16x128xf32> to vector<3x16x128xf32>
    %cst_12 = arith.constant dense<0xFF800000> : vector<16x128xf32>
    %47 = vector.multi_reduction <maximumf>, %46, %cst_12 [0] : vector<3x16x128xf32> to vector<16x128xf32>
    %48 = tpu.iota {dimensions = array<i32: 0>} : vector<3x16x128xi32>
    %c9_i32 = arith.constant 9 : i32
    %49 = vector.broadcast %c9_i32 : i32 to vector<3x16x128xi32>
    %50 = arith.addi %48, %49 : vector<3x16x128xi32>
    %51 = vector.shape_cast %47 : vector<16x128xf32> to vector<1x16x128xf32>
    %52 = vector.broadcast %51 : vector<1x16x128xf32> to vector<3x16x128xf32>
    %53 = arith.cmpf oeq, %46, %52 : vector<3x16x128xf32>
    %c256_i32_13 = arith.constant 256 : i32
    %54 = vector.broadcast %c256_i32_13 : i32 to vector<3x16x128xi32>
    %55 = arith.select %53, %50, %54 : vector<3x16x128xi1>, vector<3x16x128xi32>
    %cst_14 = arith.constant dense<2147483647> : vector<16x128xi32>
    %56 = vector.multi_reduction <minsi>, %55, %cst_14 [0] : vector<3x16x128xi32> to vector<16x128xi32>
    %57 = vector.extract_strided_slice %0 {offsets = [11, 0, 0], sizes = [3, 16, 128], strides = [1, 1, 1]} : vector<16x16x128xf32> to vector<3x16x128xf32>
    %cst_15 = arith.constant dense<0xFF800000> : vector<16x128xf32>
    %58 = vector.multi_reduction <maximumf>, %57, %cst_15 [0] : vector<3x16x128xf32> to vector<16x128xf32>
    %59 = tpu.iota {dimensions = array<i32: 0>} : vector<3x16x128xi32>
    %c11_i32 = arith.constant 11 : i32
    %60 = vector.broadcast %c11_i32 : i32 to vector<3x16x128xi32>
    %61 = arith.addi %59, %60 : vector<3x16x128xi32>
    %62 = vector.shape_cast %58 : vector<16x128xf32> to vector<1x16x128xf32>
    %63 = vector.broadcast %62 : vector<1x16x128xf32> to vector<3x16x128xf32>
    %64 = arith.cmpf oeq, %57, %63 : vector<3x16x128xf32>
    %c256_i32_16 = arith.constant 256 : i32
    %65 = vector.broadcast %c256_i32_16 : i32 to vector<3x16x128xi32>
    %66 = arith.select %64, %61, %65 : vector<3x16x128xi1>, vector<3x16x128xi32>
    %cst_17 = arith.constant dense<2147483647> : vector<16x128xi32>
    %67 = vector.multi_reduction <minsi>, %66, %cst_17 [0] : vector<3x16x128xi32> to vector<16x128xi32>
    %68 = vector.extract_strided_slice %0 {offsets = [13, 0, 0], sizes = [3, 16, 128], strides = [1, 1, 1]} : vector<16x16x128xf32> to vector<3x16x128xf32>
    %cst_18 = arith.constant dense<0xFF800000> : vector<16x128xf32>
    %69 = vector.multi_reduction <maximumf>, %68, %cst_18 [0] : vector<3x16x128xf32> to vector<16x128xf32>
    %70 = tpu.iota {dimensions = array<i32: 0>} : vector<3x16x128xi32>
    %c13_i32 = arith.constant 13 : i32
    %71 = vector.broadcast %c13_i32 : i32 to vector<3x16x128xi32>
    %72 = arith.addi %70, %71 : vector<3x16x128xi32>
    %73 = vector.shape_cast %69 : vector<16x128xf32> to vector<1x16x128xf32>
    %74 = vector.broadcast %73 : vector<1x16x128xf32> to vector<3x16x128xf32>
    %75 = arith.cmpf oeq, %68, %74 : vector<3x16x128xf32>
    %c256_i32_19 = arith.constant 256 : i32
    %76 = vector.broadcast %c256_i32_19 : i32 to vector<3x16x128xi32>
    %77 = arith.select %75, %72, %76 : vector<3x16x128xi1>, vector<3x16x128xi32>
    %cst_20 = arith.constant dense<2147483647> : vector<16x128xi32>
    %78 = vector.multi_reduction <minsi>, %77, %cst_20 [0] : vector<3x16x128xi32> to vector<16x128xi32>
    %79 = vector.shape_cast %3 : vector<16x128xf32> to vector<1x16x128xf32>
    %80 = vector.shape_cast %14 : vector<16x128xf32> to vector<1x16x128xf32>
    %81 = vector.shape_cast %25 : vector<16x128xf32> to vector<1x16x128xf32>
    %82 = vector.shape_cast %36 : vector<16x128xf32> to vector<1x16x128xf32>
    %83 = vector.shape_cast %47 : vector<16x128xf32> to vector<1x16x128xf32>
    %84 = vector.shape_cast %58 : vector<16x128xf32> to vector<1x16x128xf32>
    %85 = vector.shape_cast %69 : vector<16x128xf32> to vector<1x16x128xf32>
    %86 = tpu.concatenate %79, %80, %81, %82, %83, %84, %85 in 0 : vector<1x16x128xf32>, vector<1x16x128xf32>, vector<1x16x128xf32>, vector<1x16x128xf32>, vector<1x16x128xf32>, vector<1x16x128xf32>, vector<1x16x128xf32> -> vector<7x16x128xf32>
    %87 = vector.shape_cast %12 : vector<16x128xi32> to vector<1x16x128xi32>
    %88 = vector.shape_cast %23 : vector<16x128xi32> to vector<1x16x128xi32>
    %89 = vector.shape_cast %34 : vector<16x128xi32> to vector<1x16x128xi32>
    %90 = vector.shape_cast %45 : vector<16x128xi32> to vector<1x16x128xi32>
    %91 = vector.shape_cast %56 : vector<16x128xi32> to vector<1x16x128xi32>
    %92 = vector.shape_cast %67 : vector<16x128xi32> to vector<1x16x128xi32>
    %93 = vector.shape_cast %78 : vector<16x128xi32> to vector<1x16x128xi32>
    %94 = tpu.concatenate %87, %88, %89, %90, %91, %92, %93 in 0 : vector<1x16x128xi32>, vector<1x16x128xi32>, vector<1x16x128xi32>, vector<1x16x128xi32>, vector<1x16x128xi32>, vector<1x16x128xi32>, vector<1x16x128xi32> -> vector<7x16x128xi32>
    %c16_i32 = arith.constant 16 : i32
    %95 = vector.broadcast %c16_i32 : i32 to vector<7x16x128xi32>
    %96 = arith.muli %94, %95 : vector<7x16x128xi32>
    %97 = vector.shape_cast %1 : vector<16x128xi32> to vector<1x16x128xi32>
    %98 = vector.broadcast %97 : vector<1x16x128xi32> to vector<7x16x128xi32>
    %99 = arith.addi %96, %98 : vector<7x16x128xi32>
    %100 = vector.extract_strided_slice %86 {offsets = [0, 0, 0], sizes = [7, 3, 128], strides = [1, 1, 1]} : vector<7x16x128xf32> to vector<7x3x128xf32>
    %cst_21 = arith.constant dense<0xFF800000> : vector<7x128xf32>
    %101 = vector.multi_reduction <maximumf>, %100, %cst_21 [1] : vector<7x3x128xf32> to vector<7x128xf32>
    %102 = vector.shape_cast %101 : vector<7x128xf32> to vector<7x1x128xf32>
    %103 = vector.broadcast %102 : vector<7x1x128xf32> to vector<7x3x128xf32>
    %104 = arith.cmpf oeq, %100, %103 : vector<7x3x128xf32>
    %105 = vector.extract_strided_slice %99 {offsets = [0, 0, 0], sizes = [7, 3, 128], strides = [1, 1, 1]} : vector<7x16x128xi32> to vector<7x3x128xi32>
    %c256_i32_22 = arith.constant 256 : i32
    %106 = vector.broadcast %c256_i32_22 : i32 to vector<7x3x128xi32>
    %107 = arith.select %104, %105, %106 : vector<7x3x128xi1>, vector<7x3x128xi32>
    %cst_23 = arith.constant dense<2147483647> : vector<7x128xi32>
    %108 = vector.multi_reduction <minsi>, %107, %cst_23 [1] : vector<7x3x128xi32> to vector<7x128xi32>
    %109 = vector.extract_strided_slice %86 {offsets = [0, 2, 0], sizes = [7, 4, 128], strides = [1, 1, 1]} : vector<7x16x128xf32> to vector<7x4x128xf32>
    %cst_24 = arith.constant dense<0xFF800000> : vector<7x128xf32>
    %110 = vector.multi_reduction <maximumf>, %109, %cst_24 [1] : vector<7x4x128xf32> to vector<7x128xf32>
    %111 = vector.shape_cast %110 : vector<7x128xf32> to vector<7x1x128xf32>
    %112 = vector.broadcast %111 : vector<7x1x128xf32> to vector<7x4x128xf32>
    %113 = arith.cmpf oeq, %109, %112 : vector<7x4x128xf32>
    %114 = vector.extract_strided_slice %99 {offsets = [0, 2, 0], sizes = [7, 4, 128], strides = [1, 1, 1]} : vector<7x16x128xi32> to vector<7x4x128xi32>
    %c256_i32_25 = arith.constant 256 : i32
    %115 = vector.broadcast %c256_i32_25 : i32 to vector<7x4x128xi32>
    %116 = arith.select %113, %114, %115 : vector<7x4x128xi1>, vector<7x4x128xi32>
    %cst_26 = arith.constant dense<2147483647> : vector<7x128xi32>
    %117 = vector.multi_reduction <minsi>, %116, %cst_26 [1] : vector<7x4x128xi32> to vector<7x128xi32>
    %118 = vector.extract_strided_slice %86 {offsets = [0, 5, 0], sizes = [7, 3, 128], strides = [1, 1, 1]} : vector<7x16x128xf32> to vector<7x3x128xf32>
    %cst_27 = arith.constant dense<0xFF800000> : vector<7x128xf32>
    %119 = vector.multi_reduction <maximumf>, %118, %cst_27 [1] : vector<7x3x128xf32> to vector<7x128xf32>
    %120 = vector.shape_cast %119 : vector<7x128xf32> to vector<7x1x128xf32>
    %121 = vector.broadcast %120 : vector<7x1x128xf32> to vector<7x3x128xf32>
    %122 = arith.cmpf oeq, %118, %121 : vector<7x3x128xf32>
    %123 = vector.extract_strided_slice %99 {offsets = [0, 5, 0], sizes = [7, 3, 128], strides = [1, 1, 1]} : vector<7x16x128xi32> to vector<7x3x128xi32>
    %c256_i32_28 = arith.constant 256 : i32
    %124 = vector.broadcast %c256_i32_28 : i32 to vector<7x3x128xi32>
    %125 = arith.select %122, %123, %124 : vector<7x3x128xi1>, vector<7x3x128xi32>
    %cst_29 = arith.constant dense<2147483647> : vector<7x128xi32>
    %126 = vector.multi_reduction <minsi>, %125, %cst_29 [1] : vector<7x3x128xi32> to vector<7x128xi32>
    %127 = vector.extract_strided_slice %86 {offsets = [0, 8, 0], sizes = [7, 3, 128], strides = [1, 1, 1]} : vector<7x16x128xf32> to vector<7x3x128xf32>
    %cst_30 = arith.constant dense<0xFF800000> : vector<7x128xf32>
    %128 = vector.multi_reduction <maximumf>, %127, %cst_30 [1] : vector<7x3x128xf32> to vector<7x128xf32>
    %129 = vector.shape_cast %128 : vector<7x128xf32> to vector<7x1x128xf32>
    %130 = vector.broadcast %129 : vector<7x1x128xf32> to vector<7x3x128xf32>
    %131 = arith.cmpf oeq, %127, %130 : vector<7x3x128xf32>
    %132 = vector.extract_strided_slice %99 {offsets = [0, 8, 0], sizes = [7, 3, 128], strides = [1, 1, 1]} : vector<7x16x128xi32> to vector<7x3x128xi32>
    %c256_i32_31 = arith.constant 256 : i32
    %133 = vector.broadcast %c256_i32_31 : i32 to vector<7x3x128xi32>
    %134 = arith.select %131, %132, %133 : vector<7x3x128xi1>, vector<7x3x128xi32>
    %cst_32 = arith.constant dense<2147483647> : vector<7x128xi32>
    %135 = vector.multi_reduction <minsi>, %134, %cst_32 [1] : vector<7x3x128xi32> to vector<7x128xi32>
    %136 = vector.extract_strided_slice %86 {offsets = [0, 10, 0], sizes = [7, 4, 128], strides = [1, 1, 1]} : vector<7x16x128xf32> to vector<7x4x128xf32>
    %cst_33 = arith.constant dense<0xFF800000> : vector<7x128xf32>
    %137 = vector.multi_reduction <maximumf>, %136, %cst_33 [1] : vector<7x4x128xf32> to vector<7x128xf32>
    %138 = vector.shape_cast %137 : vector<7x128xf32> to vector<7x1x128xf32>
    %139 = vector.broadcast %138 : vector<7x1x128xf32> to vector<7x4x128xf32>
    %140 = arith.cmpf oeq, %136, %139 : vector<7x4x128xf32>
    %141 = vector.extract_strided_slice %99 {offsets = [0, 10, 0], sizes = [7, 4, 128], strides = [1, 1, 1]} : vector<7x16x128xi32> to vector<7x4x128xi32>
    %c256_i32_34 = arith.constant 256 : i32
    %142 = vector.broadcast %c256_i32_34 : i32 to vector<7x4x128xi32>
    %143 = arith.select %140, %141, %142 : vector<7x4x128xi1>, vector<7x4x128xi32>
    %cst_35 = arith.constant dense<2147483647> : vector<7x128xi32>
    %144 = vector.multi_reduction <minsi>, %143, %cst_35 [1] : vector<7x4x128xi32> to vector<7x128xi32>
    %145 = vector.extract_strided_slice %86 {offsets = [0, 13, 0], sizes = [7, 3, 128], strides = [1, 1, 1]} : vector<7x16x128xf32> to vector<7x3x128xf32>
    %cst_36 = arith.constant dense<0xFF800000> : vector<7x128xf32>
    %146 = vector.multi_reduction <maximumf>, %145, %cst_36 [1] : vector<7x3x128xf32> to vector<7x128xf32>
    %147 = vector.shape_cast %146 : vector<7x128xf32> to vector<7x1x128xf32>
    %148 = vector.broadcast %147 : vector<7x1x128xf32> to vector<7x3x128xf32>
    %149 = arith.cmpf oeq, %145, %148 : vector<7x3x128xf32>
    %150 = vector.extract_strided_slice %99 {offsets = [0, 13, 0], sizes = [7, 3, 128], strides = [1, 1, 1]} : vector<7x16x128xi32> to vector<7x3x128xi32>
    %c256_i32_37 = arith.constant 256 : i32
    %151 = vector.broadcast %c256_i32_37 : i32 to vector<7x3x128xi32>
    %152 = arith.select %149, %150, %151 : vector<7x3x128xi1>, vector<7x3x128xi32>
    %cst_38 = arith.constant dense<2147483647> : vector<7x128xi32>
    %153 = vector.multi_reduction <minsi>, %152, %cst_38 [1] : vector<7x3x128xi32> to vector<7x128xi32>
    %154 = vector.shape_cast %101 : vector<7x128xf32> to vector<1x7x128xf32>
    %155 = vector.shape_cast %110 : vector<7x128xf32> to vector<1x7x128xf32>
    %156 = vector.shape_cast %119 : vector<7x128xf32> to vector<1x7x128xf32>
    %157 = vector.shape_cast %128 : vector<7x128xf32> to vector<1x7x128xf32>
    %158 = vector.shape_cast %137 : vector<7x128xf32> to vector<1x7x128xf32>
    %159 = vector.shape_cast %146 : vector<7x128xf32> to vector<1x7x128xf32>
    %160 = tpu.concatenate %154, %155, %156, %157, %158, %159 in 0 : vector<1x7x128xf32>, vector<1x7x128xf32>, vector<1x7x128xf32>, vector<1x7x128xf32>, vector<1x7x128xf32>, vector<1x7x128xf32> -> vector<6x7x128xf32>
    %161 = vector.shape_cast %108 : vector<7x128xi32> to vector<1x7x128xi32>
    %162 = vector.shape_cast %117 : vector<7x128xi32> to vector<1x7x128xi32>
    %163 = vector.shape_cast %126 : vector<7x128xi32> to vector<1x7x128xi32>
    %164 = vector.shape_cast %135 : vector<7x128xi32> to vector<1x7x128xi32>
    %165 = vector.shape_cast %144 : vector<7x128xi32> to vector<1x7x128xi32>
    %166 = vector.shape_cast %153 : vector<7x128xi32> to vector<1x7x128xi32>
    %167 = tpu.concatenate %161, %162, %163, %164, %165, %166 in 0 : vector<1x7x128xi32>, vector<1x7x128xi32>, vector<1x7x128xi32>, vector<1x7x128xi32>, vector<1x7x128xi32>, vector<1x7x128xi32> -> vector<6x7x128xi32>
    %c0_39 = arith.constant 0 : index
    %c0_40 = arith.constant 0 : index
    %c0_41 = arith.constant 0 : index
    %168 = vector.load %arg2[%c0_39, %c0_40, %c0_41] : memref<6x7x128xf32, #tpu.memory_space<vmem>>, vector<6x7x128xf32>
    tpu.vector_store %arg2[%c0_39, %c0_40, %c0_41], %160 {strides = array<i32>} : memref<6x7x128xf32, #tpu.memory_space<vmem>>, vector<6x7x128xf32>,
    %c0_42 = arith.constant 0 : index
    %c0_43 = arith.constant 0 : index
    %c0_44 = arith.constant 0 : index
    %169 = vector.load %arg3[%c0_42, %c0_43, %c0_44] : memref<6x7x128xi32, #tpu.memory_space<vmem>>, vector<6x7x128xi32>
    tpu.vector_store %arg3[%c0_42, %c0_43, %c0_44], %167 {strides = array<i32>} : memref<6x7x128xi32, #tpu.memory_space<vmem>>, vector<6x7x128xi32>,
    %cst_45 = arith.constant dense<0xFF800000> : vector<7x128xf32>
    %170 = vector.multi_reduction <maximumf>, %160, %cst_45 [0] : vector<6x7x128xf32> to vector<7x128xf32>
    %cst_46 = arith.constant dense<0xFF800000> : vector<128xf32>
    %171 = vector.multi_reduction <maximumf>, %170, %cst_46 [0] : vector<7x128xf32> to vector<128xf32>
    %172 = vector.shape_cast %171 : vector<128xf32> to vector<1x128xf32>
    %173 = vector.shape_cast %172 : vector<1x128xf32> to vector<1x1x128xf32>
    %c0_47 = arith.constant 0 : index
    %c0_48 = arith.constant 0 : index
    %c0_49 = arith.constant 0 : index
    %174 = vector.load %arg4[%c0_47, %c0_48, %c0_49] : memref<1x1x128xf32, #tpu.memory_space<vmem>>, vector<1x1x128xf32>
    tpu.vector_store %arg4[%c0_47, %c0_48, %c0_49], %173 {strides = array<i32>} : memref<1x1x128xf32, #tpu.memory_space<vmem>>, vector<1x1x128xf32>,
    %175 = vector.extract_strided_slice %0 {offsets = [0, 0, 0], sizes = [16, 6, 128], strides = [1, 1, 1]} : vector<16x16x128xf32> to vector<16x6x128xf32>
    %cst_50 = arith.constant dense<0xFF800000> : vector<16x128xf32>
    %176 = vector.multi_reduction <maximumf>, %175, %cst_50 [1] : vector<16x6x128xf32> to vector<16x128xf32>
    %177 = vector.extract_strided_slice %0 {offsets = [0, 5, 0], sizes = [16, 6, 128], strides = [1, 1, 1]} : vector<16x16x128xf32> to vector<16x6x128xf32>
    %cst_51 = arith.constant dense<0xFF800000> : vector<16x128xf32>
    %178 = vector.multi_reduction <maximumf>, %177, %cst_51 [1] : vector<16x6x128xf32> to vector<16x128xf32>
    %179 = vector.extract_strided_slice %0 {offsets = [0, 10, 0], sizes = [16, 6, 128], strides = [1, 1, 1]} : vector<16x16x128xf32> to vector<16x6x128xf32>
    %cst_52 = arith.constant dense<0xFF800000> : vector<16x128xf32>
    %180 = vector.multi_reduction <maximumf>, %179, %cst_52 [1] : vector<16x6x128xf32> to vector<16x128xf32>
    %181 = vector.shape_cast %176 : vector<16x128xf32> to vector<1x16x128xf32>
    %182 = vector.shape_cast %178 : vector<16x128xf32> to vector<1x16x128xf32>
    %183 = vector.shape_cast %180 : vector<16x128xf32> to vector<1x16x128xf32>
    %184 = tpu.concatenate %181, %182, %183 in 0 : vector<1x16x128xf32>, vector<1x16x128xf32>, vector<1x16x128xf32> -> vector<3x16x128xf32>
    %c0_53 = arith.constant 0 : index
    %c0_54 = arith.constant 0 : index
    %c0_55 = arith.constant 0 : index
    %185 = vector.load %arg5[%c0_53, %c0_54, %c0_55] : memref<3x16x128xf32, #tpu.memory_space<vmem>>, vector<3x16x128xf32>
    tpu.vector_store %arg5[%c0_53, %c0_54, %c0_55], %184 {strides = array<i32>} : memref<3x16x128xf32, #tpu.memory_space<vmem>>, vector<3x16x128xf32>,
    %186 = vector.extract_strided_slice %0 {offsets = [0, 0, 0], sizes = [8, 16, 128], strides = [1, 1, 1]} : vector<16x16x128xf32> to vector<8x16x128xf32>
    %cst_56 = arith.constant dense<0xFF800000> : vector<16x128xf32>
    %187 = vector.multi_reduction <maximumf>, %186, %cst_56 [0] : vector<8x16x128xf32> to vector<16x128xf32>
    %188 = tpu.iota {dimensions = array<i32: 0>} : vector<8x16x128xi32>
    %c0_i32_57 = arith.constant 0 : i32
    %189 = vector.broadcast %c0_i32_57 : i32 to vector<8x16x128xi32>
    %190 = arith.addi %188, %189 : vector<8x16x128xi32>
    %191 = vector.shape_cast %187 : vector<16x128xf32> to vector<1x16x128xf32>
    %192 = vector.broadcast %191 : vector<1x16x128xf32> to vector<8x16x128xf32>
    %193 = arith.cmpf oeq, %186, %192 : vector<8x16x128xf32>
    %c256_i32_58 = arith.constant 256 : i32
    %194 = vector.broadcast %c256_i32_58 : i32 to vector<8x16x128xi32>
    %195 = arith.select %193, %190, %194 : vector<8x16x128xi1>, vector<8x16x128xi32>
    %cst_59 = arith.constant dense<2147483647> : vector<16x128xi32>
    %196 = vector.multi_reduction <minsi>, %195, %cst_59 [0] : vector<8x16x128xi32> to vector<16x128xi32>
    %c16_i32_60 = arith.constant 16 : i32
    %197 = vector.broadcast %c16_i32_60 : i32 to vector<16x128xi32>
    %198 = arith.muli %196, %197 : vector<16x128xi32>
    %199 = arith.addi %198, %1 : vector<16x128xi32>
    %200 = vector.extract_strided_slice %0 {offsets = [8, 0, 0], sizes = [8, 16, 128], strides = [1, 1, 1]} : vector<16x16x128xf32> to vector<8x16x128xf32>
    %cst_61 = arith.constant dense<0xFF800000> : vector<16x128xf32>
    %201 = vector.multi_reduction <maximumf>, %200, %cst_61 [0] : vector<8x16x128xf32> to vector<16x128xf32>
    %202 = tpu.iota {dimensions = array<i32: 0>} : vector<8x16x128xi32>
    %c8_i32 = arith.constant 8 : i32
    %203 = vector.broadcast %c8_i32 : i32 to vector<8x16x128xi32>
    %204 = arith.addi %202, %203 : vector<8x16x128xi32>
    %205 = vector.shape_cast %201 : vector<16x128xf32> to vector<1x16x128xf32>
    %206 = vector.broadcast %205 : vector<1x16x128xf32> to vector<8x16x128xf32>
    %207 = arith.cmpf oeq, %200, %206 : vector<8x16x128xf32>
    %c256_i32_62 = arith.constant 256 : i32
    %208 = vector.broadcast %c256_i32_62 : i32 to vector<8x16x128xi32>
    %209 = arith.select %207, %204, %208 : vector<8x16x128xi1>, vector<8x16x128xi32>
    %cst_63 = arith.constant dense<2147483647> : vector<16x128xi32>
    %210 = vector.multi_reduction <minsi>, %209, %cst_63 [0] : vector<8x16x128xi32> to vector<16x128xi32>
    %c16_i32_64 = arith.constant 16 : i32
    %211 = vector.broadcast %c16_i32_64 : i32 to vector<16x128xi32>
    %212 = arith.muli %210, %211 : vector<16x128xi32>
    %213 = arith.addi %212, %1 : vector<16x128xi32>
    %214 = vector.shape_cast %187 : vector<16x128xf32> to vector<1x16x128xf32>
    %215 = vector.shape_cast %201 : vector<16x128xf32> to vector<1x16x128xf32>
    %216 = tpu.concatenate %214, %215 in 0 : vector<1x16x128xf32>, vector<1x16x128xf32> -> vector<2x16x128xf32>
    %c0_65 = arith.constant 0 : index
    %c0_66 = arith.constant 0 : index
    %c0_67 = arith.constant 0 : index
    %217 = vector.load %arg6[%c0_65, %c0_66, %c0_67] : memref<2x16x128xf32, #tpu.memory_space<vmem>>, vector<2x16x128xf32>
    tpu.vector_store %arg6[%c0_65, %c0_66, %c0_67], %216 {strides = array<i32>} : memref<2x16x128xf32, #tpu.memory_space<vmem>>, vector<2x16x128xf32>,
    %218 = vector.shape_cast %199 : vector<16x128xi32> to vector<1x16x128xi32>
    %219 = vector.shape_cast %213 : vector<16x128xi32> to vector<1x16x128xi32>
    %220 = tpu.concatenate %218, %219 in 0 : vector<1x16x128xi32>, vector<1x16x128xi32> -> vector<2x16x128xi32>
    %c0_68 = arith.constant 0 : index
    %c0_69 = arith.constant 0 : index
    %c0_70 = arith.constant 0 : index
    %221 = vector.load %arg7[%c0_68, %c0_69, %c0_70] : memref<2x16x128xi32, #tpu.memory_space<vmem>>, vector<2x16x128xi32>
    tpu.vector_store %arg7[%c0_68, %c0_69, %c0_70], %220 {strides = array<i32>} : memref<2x16x128xi32, #tpu.memory_space<vmem>>, vector<2x16x128xi32>,
    return
  }
  func.func @transform_0(%arg0: i32) -> (i32, i32, i32) {
    %c0_i32 = arith.constant 0 : i32
    %c0_i32_0 = arith.constant 0 : i32
    %c0_i32_1 = arith.constant 0 : i32
    return %c0_i32, %c0_i32_0, %arg0 : i32, i32, i32
  }
  func.func @transform_1(%arg0: i32) -> (i32, i32, i32) {
    %c0_i32 = arith.constant 0 : i32
    %c0_i32_0 = arith.constant 0 : i32
    %c0_i32_1 = arith.constant 0 : i32
    return %c0_i32, %c0_i32_0, %arg0 : i32, i32, i32
  }
  func.func @transform_2(%arg0: i32) -> (i32, i32, i32) {
    %c0_i32 = arith.constant 0 : i32
    %c0_i32_0 = arith.constant 0 : i32
    %c0_i32_1 = arith.constant 0 : i32
    return %c0_i32, %c0_i32_0, %arg0 : i32, i32, i32
  }
  func.func @transform_3(%arg0: i32) -> (i32, i32, i32) {
    %c0_i32 = arith.constant 0 : i32
    %c0_i32_0 = arith.constant 0 : i32
    %c0_i32_1 = arith.constant 0 : i32
    return %c0_i32, %c0_i32_0, %arg0 : i32, i32, i32
  }
  func.func @transform_4(%arg0: i32) -> (i32, i32, i32) {
    %c0_i32 = arith.constant 0 : i32
    %c0_i32_0 = arith.constant 0 : i32
    %c0_i32_1 = arith.constant 0 : i32
    return %c0_i32, %c0_i32_0, %arg0 : i32, i32, i32
  }
  func.func @transform_5(%arg0: i32) -> (i32, i32, i32) {
    %c0_i32 = arith.constant 0 : i32
    %c0_i32_0 = arith.constant 0 : i32
    %c0_i32_1 = arith.constant 0 : i32
    return %c0_i32, %c0_i32_0, %arg0 : i32, i32, i32
  }
  func.func @transform_6(%arg0: i32) -> (i32, i32, i32) {
    %c0_i32 = arith.constant 0 : i32
    %c0_i32_0 = arith.constant 0 : i32
    %c0_i32_1 = arith.constant 0 : i32
    return %c0_i32, %c0_i32_0, %arg0 : i32, i32, i32
  }
}

</mosaic_0001>

<llo_original>
// kernel: tpu_custom_call.1
$region0: #{tpu_custom_call.1}
  #allocation0 [shape = 'u32[]', space=smem, size = 0x4, offset = 0x4, fixed_abs, tag = 'smem constant byte address 0x4 - core index']
  #allocation1 [shape = 'u32[144,128]{1,0:T(1,128)}', space=vmem, size = 0x12000, scoped, tag = 'internal scratch']
  %s0 = inlined_call_operand.hbm [shape: f32[16,16,128], index: 0, kind: input, shape index: {}]
  %s1 = inlined_call_operand.hbm [shape: f32[6,7,128], index: 1, kind: output, shape index: {0}]
  %s2 = inlined_call_operand.hbm [shape: s32[6,7,128], index: 2, kind: output, shape index: {1}]
  %s3 = inlined_call_operand.hbm [shape: f32[1,1,128], index: 3, kind: output, shape index: {2}]
  %s4 = inlined_call_operand.hbm [shape: f32[3,16,128], index: 4, kind: output, shape index: {3}]
  %s5 = inlined_call_operand.hbm [shape: f32[2,16,128], index: 5, kind: output, shape index: {4}]
  %s6 = inlined_call_operand.hbm [shape: s32[2,16,128], index: 6, kind: output, shape index: {5}]
  %7 = xla_tuple %s1, %s2, %s3, %s4, %s5, %s6
  %s8 = sld [smem:[#allocation0]]
  $region58: #{tpu_custom_call.1} parent=0
    _
  %s10 = ssub.s32 1, %s8
  %s11 = scalar_select 0, %s10, %s8
  $region1: #{tpu_custom_call.1} parent=0
    #allocation2 [shape = 'u8[131072]{0}', space=vmem, size = 0x20000, scoped, tag = 'input window, operand 0, single buffered']
    #allocation3 [shape = 's32[1]{0}', space=sflag, size = 0x4, scoped, tag = 'scoped memory for tpu_custom_call.1']
    #allocation4 [shape = 's32[1]{0}', space=sflag, size = 0x4, scoped, tag = 'scoped memory for tpu_custom_call.1']
    #allocation5 [shape = 'u8[24576]{0}', space=vmem, size = 0x6000, scoped, tag = 'output window, operand 0, single buffered']
    #allocation6 [shape = 'u8[24576]{0}', space=vmem, size = 0x6000, scoped, tag = 'output window, operand 1, single buffered']
    #allocation7 [shape = 's32[1]{0}', space=sflag, size = 0x4, scoped, tag = 'scoped memory for tpu_custom_call.1']
    #allocation8 [shape = 'u8[512]{0}', space=vmem, size = 0x400, scoped, tag = 'output window, operand 2, single buffered']
    #allocation9 [shape = 'u8[24576]{0}', space=vmem, size = 0x6000, scoped, tag = 'output window, operand 3, single buffered']
    #allocation10 [shape = 's32[1]{0}', space=sflag, size = 0x4, scoped, tag = 'scoped memory for tpu_custom_call.1']
    #allocation11 [shape = 'u8[16384]{0}', space=vmem, size = 0x4000, scoped, tag = 'output window, operand 4, single buffered']
    #allocation12 [shape = 'u8[16384]{0}', space=vmem, size = 0x4000, scoped, tag = 'output window, operand 5, single buffered']
    #allocation13 [shape = 's32[1]{0}', space=sflag, size = 0x4, scoped, tag = 'scoped memory for tpu_custom_call.1']
    %12 = vsyncpa [#allocation3], 0
    %13 = vsyncpa [#allocation4], 0
    %14 = vsyncpa [#allocation7], 0
    %15 = vsyncpa [#allocation10], 0
    %16 = vsyncpa [#allocation13], 0
    // Predicated region
    $region2: #{tpu_custom_call.1} parent=1 // pred_check
      _
    $region3: #{tpu_custom_call.1} parent=1 // pred_check_branch
      %18 = sbr.rel (0) target = $region5
    $region4: #{tpu_custom_call.1} parent=1 // pred_region
      %s20 = ssub.s32 4096, 4096
      %21 = vsyncadd [#allocation3], %s20
      %s22 = sshll.u32 [#allocation2], 4
      %s23 = int_to_ptr.vmem [resolvable:$true] %s22
      %28 = dma.hbm_to_vmem [thread:$0]  %s0, 4096, %s23, [#allocation3], 128, 128, 8
    $region5: #{tpu_custom_call.1} parent=1 // pred_fallthru
      _
    // Predicated region
    $region6: #{tpu_custom_call.1} parent=1 // pred_check
      _
    $region7: #{tpu_custom_call.1} parent=1 // pred_check_branch
      %30 = sbr.rel (0) target = $region9
    $region8: #{tpu_custom_call.1} parent=1 // pred_region
      %31 = dma.done [#allocation3], 4096
    $region9: #{tpu_custom_call.1} parent=1 // pred_fallthru
      _
    %v32 = vld [vmem:[#allocation2] sm:$0xff]
    %v33 = vld [vmem:[#allocation2 + $0x8] sm:$0xff]
    %v34 = vld [vmem:[#allocation2 + $0x10] sm:$0xff]
    %v35 = vld [vmem:[#allocation2 + $0x18] sm:$0xff]
    %v36 = vld [vmem:[#allocation2 + $0x20] sm:$0xff]
    %v37 = vld [vmem:[#allocation2 + $0x28] sm:$0xff]
    %v38 = vld [vmem:[#allocation2 + $0x30] sm:$0xff]
    %v39 = vld [vmem:[#allocation2 + $0x38] sm:$0xff]
    %v40 = vld [vmem:[#allocation2 + $0x40] sm:$0xff]
    %v41 = vld [vmem:[#allocation2 + $0x48] sm:$0xff]
    %v42 = vld [vmem:[#allocation2 + $0x50] sm:$0xff]
    %v43 = vld [vmem:[#allocation2 + $0x58] sm:$0xff]
    %v44 = vld [vmem:[#allocation2 + $0x60] sm:$0xff]
    %v45 = vld [vmem:[#allocation2 + $0x68] sm:$0xff]
    %v46 = vld [vmem:[#allocation2 + $0x70] sm:$0xff]
    %v47 = vld [vmem:[#allocation2 + $0x78] sm:$0xff]
    %v48 = vld [vmem:[#allocation2 + $0x80] sm:$0xff]
    %v49 = vld [vmem:[#allocation2 + $0x88] sm:$0xff]
    %v50 = vld [vmem:[#allocation2 + $0x90] sm:$0xff]
    %v51 = vld [vmem:[#allocation2 + $0x98] sm:$0xff]
    %v52 = vld [vmem:[#allocation2 + $0xa0] sm:$0xff]
    %v53 = vld [vmem:[#allocation2 + $0xa8] sm:$0xff]
    %v54 = vld [vmem:[#allocation2 + $0xb0] sm:$0xff]
    %v55 = vld [vmem:[#allocation2 + $0xb8] sm:$0xff]
    %v56 = vld [vmem:[#allocation2 + $0xc0] sm:$0xff]
    %v57 = vld [vmem:[#allocation2 + $0xc8] sm:$0xff]
    %v58 = vld [vmem:[#allocation2 + $0xd0] sm:$0xff]
    %v59 = vld [vmem:[#allocation2 + $0xd8] sm:$0xff]
    %v60 = vld [vmem:[#allocation2 + $0xe0] sm:$0xff]
    %v61 = vld [vmem:[#allocation2 + $0xe8] sm:$0xff]
    %v62 = vld [vmem:[#allocation2 + $0xf0] sm:$0xff]
    %v63 = vld [vmem:[#allocation2 + $0xf8] sm:$0xff]
    %v64 = vlaneseq
    %v65 = vshrl.u32 %v64, 7
    %v66 = vadd.s32 %v65, 8
    %v67 = vmax.f32 %v32, %v36
    %v68 = vmax.f32 %v67, %v34
    %v69 = vmax.f32 %v33, %v37
    %v70 = vmax.f32 %v69, %v35
    %vm71 = vcmp.eq.f32.partialorder %v32, %v68
    %vm72 = vcmp.eq.f32.partialorder %v33, %v70
    %vm73 = vcmp.eq.f32.partialorder %v34, %v68
    %vm74 = vcmp.eq.f32.partialorder %v35, %v70
    %vm75 = vcmp.eq.f32.partialorder %v36, %v68
    %vm76 = vcmp.eq.f32.partialorder %v37, %v70
    %v77 = vsel %vm71, 0, 256
    %v78 = vsel %vm72, 0, 256
    %v79 = vsel %vm73, 1, 256
    %v80 = vsel %vm74, 1, 256
    %v81 = vsel %vm75, 2, 256
    %v82 = vsel %vm76, 2, 256
    %vm83 = vcmp.lt.s32.totalorder %v77, %v81
    %v84 = vsel %vm83, %v77, %v81
    %vm85 = vcmp.lt.s32.totalorder %v84, %v79
    %v86 = vsel %vm85, %v84, %v79
    %vm87 = vcmp.lt.s32.totalorder %v78, %v82
    %v88 = vsel %vm87, %v78, %v82
    %vm89 = vcmp.lt.s32.totalorder %v88, %v80
    %v90 = vsel %vm89, %v88, %v80
    %v91 = vmax.f32 %v36, %v40
    %v92 = vmax.f32 %v91, %v38
    %v93 = vmax.f32 %v37, %v41
    %v94 = vmax.f32 %v93, %v39
    %vm95 = vcmp.eq.f32.partialorder %v36, %v92
    %vm96 = vcmp.eq.f32.partialorder %v37, %v94
    %vm97 = vcmp.eq.f32.partialorder %v38, %v92
    %vm98 = vcmp.eq.f32.partialorder %v39, %v94
    %vm99 = vcmp.eq.f32.partialorder %v40, %v92
    %vm100 = vcmp.eq.f32.partialorder %v41, %v94
    %v101 = vsel %vm95, 2, 256
    %v102 = vsel %vm96, 2, 256
    %v103 = vsel %vm97, 3, 256
    %v104 = vsel %vm98, 3, 256
    %v105 = vsel %vm99, 4, 256
    %v106 = vsel %vm100, 4, 256
    %vm107 = vcmp.lt.s32.totalorder %v101, %v105
    %v108 = vsel %vm107, %v101, %v105
    %vm109 = vcmp.lt.s32.totalorder %v108, %v103
    %v110 = vsel %vm109, %v108, %v103
    %vm111 = vcmp.lt.s32.totalorder %v102, %v106
    %v112 = vsel %vm111, %v102, %v106
    %vm113 = vcmp.lt.s32.totalorder %v112, %v104
    %v114 = vsel %vm113, %v112, %v104
    %v115 = vmax.f32 %v40, %v44
    %v116 = vmax.f32 %v115, %v42
    %v117 = vmax.f32 %v41, %v45
    %v118 = vmax.f32 %v117, %v43
    %vm119 = vcmp.eq.f32.partialorder %v40, %v116
    %vm120 = vcmp.eq.f32.partialorder %v41, %v118
    %vm121 = vcmp.eq.f32.partialorder %v42, %v116
    %vm122 = vcmp.eq.f32.partialorder %v43, %v118
    %vm123 = vcmp.eq.f32.partialorder %v44, %v116
    %vm124 = vcmp.eq.f32.partialorder %v45, %v118
    %v125 = vsel %vm119, 4, 256
    %v126 = vsel %vm120, 4, 256
    %v127 = vsel %vm121, 5, 256
    %v128 = vsel %vm122, 5, 256
    %v129 = vsel %vm123, 6, 256
    %v130 = vsel %vm124, 6, 256
    %vm131 = vcmp.lt.s32.totalorder %v125, %v129
    %v132 = vsel %vm131, %v125, %v129
    %vm133 = vcmp.lt.s32.totalorder %v132, %v127
    %v134 = vsel %vm133, %v132, %v127
    %vm135 = vcmp.lt.s32.totalorder %v126, %v130
    %v136 = vsel %vm135, %v126, %v130
    %vm137 = vcmp.lt.s32.totalorder %v136, %v128
    %v138 = vsel %vm137, %v136, %v128
    %v139 = vmax.f32 %v44, %v48
    %v140 = vmax.f32 %v46, %v50
    %v141 = vmax.f32 %v139, %v140
    %v142 = vmax.f32 %v45, %v49
    %v143 = vmax.f32 %v47, %v51
    %v144 = vmax.f32 %v142, %v143
    %vm145 = vcmp.eq.f32.partialorder %v44, %v141
    %vm146 = vcmp.eq.f32.partialorder %v45, %v144
    %vm147 = vcmp.eq.f32.partialorder %v46, %v141
    %vm148 = vcmp.eq.f32.partialorder %v47, %v144
    %vm149 = vcmp.eq.f32.partialorder %v48, %v141
    %vm150 = vcmp.eq.f32.partialorder %v49, %v144
    %vm151 = vcmp.eq.f32.partialorder %v50, %v141
    %vm152 = vcmp.eq.f32.partialorder %v51, %v144
    %v153 = vsel %vm145, 6, 256
    %v154 = vsel %vm146, 6, 256
    %v155 = vsel %vm147, 7, 256
    %v156 = vsel %vm148, 7, 256
    %v157 = vsel %vm149, 8, 256
    %v158 = vsel %vm150, 8, 256
    %v159 = vsel %vm151, 9, 256
    %v160 = vsel %vm152, 9, 256
    %vm161 = vcmp.lt.s32.totalorder %v153, %v157
    %v162 = vsel %vm161, %v153, %v157
    %vm163 = vcmp.lt.s32.totalorder %v155, %v159
    %v164 = vsel %vm163, %v155, %v159
    %vm165 = vcmp.lt.s32.totalorder %v162, %v164
    %v166 = vsel %vm165, %v162, %v164
    %vm167 = vcmp.lt.s32.totalorder %v154, %v158
    %v168 = vsel %vm167, %v154, %v158
    %vm169 = vcmp.lt.s32.totalorder %v156, %v160
    %v170 = vsel %vm169, %v156, %v160
    %vm171 = vcmp.lt.s32.totalorder %v168, %v170
    %v172 = vsel %vm171, %v168, %v170
    %v173 = vmax.f32 %v50, %v54
    %v174 = vmax.f32 %v173, %v52
    %v175 = vmax.f32 %v51, %v55
    %v176 = vmax.f32 %v175, %v53
    %vm177 = vcmp.eq.f32.partialorder %v50, %v174
    %vm178 = vcmp.eq.f32.partialorder %v51, %v176
    %vm179 = vcmp.eq.f32.partialorder %v52, %v174
    %vm180 = vcmp.eq.f32.partialorder %v53, %v176
    %vm181 = vcmp.eq.f32.partialorder %v54, %v174
    %vm182 = vcmp.eq.f32.partialorder %v55, %v176
    %v183 = vsel %vm177, 9, 256
    %v184 = vsel %vm178, 9, 256
    %v185 = vsel %vm179, 10, 256
    %v186 = vsel %vm180, 10, 256
    %v187 = vsel %vm181, 11, 256
    %v188 = vsel %vm182, 11, 256
    %vm189 = vcmp.lt.s32.totalorder %v183, %v187
    %v190 = vsel %vm189, %v183, %v187
    %vm191 = vcmp.lt.s32.totalorder %v190, %v185
    %v192 = vsel %vm191, %v190, %v185
    %vm193 = vcmp.lt.s32.totalorder %v184, %v188
    %v194 = vsel %vm193, %v184, %v188
    %vm195 = vcmp.lt.s32.totalorder %v194, %v186
    %v196 = vsel %vm195, %v194, %v186
    %v197 = vmax.f32 %v54, %v58
    %v198 = vmax.f32 %v197, %v56
    %v199 = vmax.f32 %v55, %v59
    %v200 = vmax.f32 %v199, %v57
    %vm201 = vcmp.eq.f32.partialorder %v54, %v198
    %vm202 = vcmp.eq.f32.partialorder %v55, %v200
    %vm203 = vcmp.eq.f32.partialorder %v56, %v198
    %vm204 = vcmp.eq.f32.partialorder %v57, %v200
    %vm205 = vcmp.eq.f32.partialorder %v58, %v198
    %vm206 = vcmp.eq.f32.partialorder %v59, %v200
    %v207 = vsel %vm201, 11, 256
    %v208 = vsel %vm202, 11, 256
    %v209 = vsel %vm203, 12, 256
    %v210 = vsel %vm204, 12, 256
    %v211 = vsel %vm205, 13, 256
    %v212 = vsel %vm206, 13, 256
    %vm213 = vcmp.lt.s32.totalorder %v207, %v211
    %v214 = vsel %vm213, %v207, %v211
    %vm215 = vcmp.lt.s32.totalorder %v214, %v209
    %v216 = vsel %vm215, %v214, %v209
    %vm217 = vcmp.lt.s32.totalorder %v208, %v212
    %v218 = vsel %vm217, %v208, %v212
    %vm219 = vcmp.lt.s32.totalorder %v218, %v210
    %v220 = vsel %vm219, %v218, %v210
    %v221 = vmax.f32 %v58, %v62
    %v222 = vmax.f32 %v221, %v60
    %v223 = vmax.f32 %v59, %v63
    %v224 = vmax.f32 %v223, %v61
    %vm225 = vcmp.eq.f32.partialorder %v58, %v222
    %vm226 = vcmp.eq.f32.partialorder %v59, %v224
    %vm227 = vcmp.eq.f32.partialorder %v60, %v222
    %vm228 = vcmp.eq.f32.partialorder %v61, %v224
    %vm229 = vcmp.eq.f32.partialorder %v62, %v222
    %vm230 = vcmp.eq.f32.partialorder %v63, %v224
    %v231 = vsel %vm225, 13, 256
    %v232 = vsel %vm226, 13, 256
    %v233 = vsel %vm227, 14, 256
    %v234 = vsel %vm228, 14, 256
    %v235 = vsel %vm229, 15, 256
    %v236 = vsel %vm230, 15, 256
    %vm237 = vcmp.lt.s32.totalorder %v231, %v235
    %v238 = vsel %vm237, %v231, %v235
    %vm239 = vcmp.lt.s32.totalorder %v238, %v233
    %v240 = vsel %vm239, %v238, %v233
    %vm241 = vcmp.lt.s32.totalorder %v232, %v236
    %v242 = vsel %vm241, %v232, %v236
    %vm243 = vcmp.lt.s32.totalorder %v242, %v234
    %v244 = vsel %vm243, %v242, %v234
    %v245 = vmul.u32 %v86, 16
    %v246 = vmul.u32 %v90, 16
    %v247 = vmul.u32 %v110, 16
    %v248 = vmul.u32 %v114, 16
    %v249 = vmul.u32 %v134, 16
    %v250 = vmul.u32 %v138, 16
    %v251 = vmul.u32 %v166, 16
    %v252 = vmul.u32 %v172, 16
    %v253 = vmul.u32 %v192, 16
    %v254 = vmul.u32 %v196, 16
    %v255 = vmul.u32 %v216, 16
    %v256 = vmul.u32 %v220, 16
    %v257 = vmul.u32 %v240, 16
    %v258 = vmul.u32 %v244, 16
    %v259 = vadd.s32 %v245, %v65
    %v260 = vadd.s32 %v246, %v66
    %v261 = vadd.s32 %v247, %v65
    %v262 = vadd.s32 %v248, %v66
    %v263 = vadd.s32 %v249, %v65
    %v264 = vadd.s32 %v250, %v66
    %v265 = vadd.s32 %v251, %v65
    %v266 = vadd.s32 %v252, %v66
    %v267 = vadd.s32 %v253, %v65
    %v268 = vadd.s32 %v254, %v66
    %v269 = vadd.s32 %v255, %v65
    %v270 = vadd.s32 %v256, %v66
    %v271 = vadd.s32 %v257, %v65
    %v272 = vadd.s32 %v258, %v66
    %vm273 = vcmask 1042432
    %v274 = vsel %vm273, %v68, -inf
    %v275 = vrot.slane %v274, 4
    %v276 = vmax.f32 %v274, %v275
    %v277 = vrot.slane %v276, 2
    %v278 = vmax.f32 %v276, %v277
    %v279 = vrot.slane %v278, 1
    %v280 = vmax.f32 %v278, %v279
    %v281 = vsel %vm273, %v92, -inf
    %v282 = vrot.slane %v281, 4
    %v283 = vmax.f32 %v281, %v282
    %v284 = vrot.slane %v283, 2
    %v285 = vmax.f32 %v283, %v284
    %v286 = vrot.slane %v285, 1
    %v287 = vmax.f32 %v285, %v286
    %v288 = vsel %vm273, %v116, -inf
    %v289 = vrot.slane %v288, 4
    %v290 = vmax.f32 %v288, %v289
    %v291 = vrot.slane %v290, 2
    %v292 = vmax.f32 %v290, %v291
    %v293 = vrot.slane %v292, 1
    %v294 = vmax.f32 %v292, %v293
    %v295 = vsel %vm273, %v141, -inf
    %v296 = vrot.slane %v295, 4
    %v297 = vmax.f32 %v295, %v296
    %v298 = vrot.slane %v297, 2
    %v299 = vmax.f32 %v297, %v298
    %v300 = vrot.slane %v299, 1
    %v301 = vmax.f32 %v299, %v300
    %v302 = vsel %vm273, %v174, -inf
    %v303 = vrot.slane %v302, 4
    %v304 = vmax.f32 %v302, %v303
    %v305 = vrot.slane %v304, 2
    %v306 = vmax.f32 %v304, %v305
    %v307 = vrot.slane %v306, 1
    %v308 = vmax.f32 %v306, %v307
    %v309 = vsel %vm273, %v198, -inf
    %v310 = vrot.slane %v309, 4
    %v311 = vmax.f32 %v309, %v310
    %v312 = vrot.slane %v311, 2
    %v313 = vmax.f32 %v311, %v312
    %v314 = vrot.slane %v313, 1
    %v315 = vmax.f32 %v313, %v314
    %v316 = vsel %vm273, %v222, -inf
    %v317 = vrot.slane %v316, 4
    %v318 = vmax.f32 %v316, %v317
    %v319 = vrot.slane %v318, 2
    %v320 = vmax.f32 %v318, %v319
    %v321 = vrot.slane %v320, 1
    %v322 = vmax.f32 %v320, %v321
    %vm323 = vcmp.eq.f32.partialorder %v68, %v280
    %vm324 = vcmp.eq.f32.partialorder %v92, %v287
    %vm325 = vcmp.eq.f32.partialorder %v116, %v294
    %vm326 = vcmp.eq.f32.partialorder %v141, %v301
    %vm327 = vcmp.eq.f32.partialorder %v174, %v308
    %vm328 = vcmp.eq.f32.partialorder %v198, %v315
    %vm329 = vcmp.eq.f32.partialorder %v222, %v322
    %v330 = vsel %vm323, %v259, 256
    %v331 = vsel %vm324, %v261, 256
    %v332 = vsel %vm325, %v263, 256
    %v333 = vsel %vm326, %v265, 256
    %v334 = vsel %vm327, %v267, 256
    %v335 = vsel %vm328, %v269, 256
    %v336 = vsel %vm329, %v271, 256
    %v337 = vsel %vm273, %v330, 2147483647
    %v338 = vrot.slane %v337, 4
    %vm339 = vcmp.lt.s32.totalorder %v337, %v338
    %v340 = vsel %vm339, %v337, %v338
    %v341 = vrot.slane %v340, 2
    %vm342 = vcmp.lt.s32.totalorder %v340, %v341
    %v343 = vsel %vm342, %v340, %v341
    %v344 = vrot.slane %v343, 1
    %vm345 = vcmp.lt.s32.totalorder %v343, %v344
    %v346 = vsel %vm345, %v343, %v344
    %v347 = vsel %vm273, %v331, 2147483647
    %v348 = vrot.slane %v347, 4
    %vm349 = vcmp.lt.s32.totalorder %v347, %v348
    %v350 = vsel %vm349, %v347, %v348
    %v351 = vrot.slane %v350, 2
    %vm352 = vcmp.lt.s32.totalorder %v350, %v351
    %v353 = vsel %vm352, %v350, %v351
    %v354 = vrot.slane %v353, 1
    %vm355 = vcmp.lt.s32.totalorder %v353, %v354
    %v356 = vsel %vm355, %v353, %v354
    %v357 = vsel %vm273, %v332, 2147483647
    %v358 = vrot.slane %v357, 4
    %vm359 = vcmp.lt.s32.totalorder %v357, %v358
    %v360 = vsel %vm359, %v357, %v358
    %v361 = vrot.slane %v360, 2
    %vm362 = vcmp.lt.s32.totalorder %v360, %v361
    %v363 = vsel %vm362, %v360, %v361
    %v364 = vrot.slane %v363, 1
    %vm365 = vcmp.lt.s32.totalorder %v363, %v364
    %v366 = vsel %vm365, %v363, %v364
    %v367 = vsel %vm273, %v333, 2147483647
    %v368 = vrot.slane %v367, 4
    %vm369 = vcmp.lt.s32.totalorder %v367, %v368
    %v370 = vsel %vm369, %v367, %v368
    %v371 = vrot.slane %v370, 2
    %vm372 = vcmp.lt.s32.totalorder %v370, %v371
    %v373 = vsel %vm372, %v370, %v371
    %v374 = vrot.slane %v373, 1
    %vm375 = vcmp.lt.s32.totalorder %v373, %v374
    %v376 = vsel %vm375, %v373, %v374
    %v377 = vsel %vm273, %v334, 2147483647
    %v378 = vrot.slane %v377, 4
    %vm379 = vcmp.lt.s32.totalorder %v377, %v378
    %v380 = vsel %vm379, %v377, %v378
    %v381 = vrot.slane %v380, 2
    %vm382 = vcmp.lt.s32.totalorder %v380, %v381
    %v383 = vsel %vm382, %v380, %v381
    %v384 = vrot.slane %v383, 1
    %vm385 = vcmp.lt.s32.totalorder %v383, %v384
    %v386 = vsel %vm385, %v383, %v384
    %v387 = vsel %vm273, %v335, 2147483647
    %v388 = vrot.slane %v387, 4
    %vm389 = vcmp.lt.s32.totalorder %v387, %v388
    %v390 = vsel %vm389, %v387, %v388
    %v391 = vrot.slane %v390, 2
    %vm392 = vcmp.lt.s32.totalorder %v390, %v391
    %v393 = vsel %vm392, %v390, %v391
    %v394 = vrot.slane %v393, 1
    %vm395 = vcmp.lt.s32.totalorder %v393, %v394
    %v396 = vsel %vm395, %v393, %v394
    %v397 = vsel %vm273, %v336, 2147483647
    %v398 = vrot.slane %v397, 4
    %vm399 = vcmp.lt.s32.totalorder %v397, %v398
    %v400 = vsel %vm399, %v397, %v398
    %v401 = vrot.slane %v400, 2
    %vm402 = vcmp.lt.s32.totalorder %v400, %v401
    %v403 = vsel %vm402, %v400, %v401
    %v404 = vrot.slane %v403, 1
    %vm405 = vcmp.lt.s32.totalorder %v403, %v404
    %v406 = vsel %vm405, %v403, %v404
    %vm407 = vcmask 1045506
    %v408 = vsel %vm407, %v68, -inf
    %v409 = vrot.slane %v408, 4
    %v410 = vmax.f32 %v408, %v409
    %v411 = vrot.slane %v410, 2
    %v412 = vmax.f32 %v410, %v411
    %v413 = vrot.slane %v412, 1
    %v414 = vmax.f32 %v412, %v413
    %v415 = vsel %vm407, %v92, -inf
    %v416 = vrot.slane %v415, 4
    %v417 = vmax.f32 %v415, %v416
    %v418 = vrot.slane %v417, 2
    %v419 = vmax.f32 %v417, %v418
    %v420 = vrot.slane %v419, 1
    %v421 = vmax.f32 %v419, %v420
    %v422 = vsel %vm407, %v116, -inf
    %v423 = vrot.slane %v422, 4
    %v424 = vmax.f32 %v422, %v423
    %v425 = vrot.slane %v424, 2
    %v426 = vmax.f32 %v424, %v425
    %v427 = vrot.slane %v426, 1
    %v428 = vmax.f32 %v426, %v427
    %v429 = vsel %vm407, %v141, -inf
    %v430 = vrot.slane %v429, 4
    %v431 = vmax.f32 %v429, %v430
    %v432 = vrot.slane %v431, 2
    %v433 = vmax.f32 %v431, %v432
    %v434 = vrot.slane %v433, 1
    %v435 = vmax.f32 %v433, %v434
    %v436 = vsel %vm407, %v174, -inf
    %v437 = vrot.slane %v436, 4
    %v438 = vmax.f32 %v436, %v437
    %v439 = vrot.slane %v438, 2
    %v440 = vmax.f32 %v438, %v439
    %v441 = vrot.slane %v440, 1
    %v442 = vmax.f32 %v440, %v441
    %v443 = vsel %vm407, %v198, -inf
    %v444 = vrot.slane %v443, 4
    %v445 = vmax.f32 %v443, %v444
    %v446 = vrot.slane %v445, 2
    %v447 = vmax.f32 %v445, %v446
    %v448 = vrot.slane %v447, 1
    %v449 = vmax.f32 %v447, %v448
    %v450 = vsel %vm407, %v222, -inf
    %v451 = vrot.slane %v450, 4
    %v452 = vmax.f32 %v450, %v451
    %v453 = vrot.slane %v452, 2
    %v454 = vmax.f32 %v452, %v453
    %v455 = vrot.slane %v454, 1
    %v456 = vmax.f32 %v454, %v455
    %vm457 = vcmp.eq.f32.partialorder %v68, %v414
    %vm458 = vcmp.eq.f32.partialorder %v92, %v421
    %vm459 = vcmp.eq.f32.partialorder %v116, %v428
    %vm460 = vcmp.eq.f32.partialorder %v141, %v435
    %vm461 = vcmp.eq.f32.partialorder %v174, %v442
    %vm462 = vcmp.eq.f32.partialorder %v198, %v449
    %vm463 = vcmp.eq.f32.partialorder %v222, %v456
    %v464 = vsel %vm457, %v259, 256
    %v465 = vsel %vm458, %v261, 256
    %v466 = vsel %vm459, %v263, 256
    %v467 = vsel %vm460, %v265, 256
    %v468 = vsel %vm461, %v267, 256
    %v469 = vsel %vm462, %v269, 256
    %v470 = vsel %vm463, %v271, 256
    %v471 = vsel %vm407, %v464, 2147483647
    %v472 = vrot.slane %v471, 4
    %vm473 = vcmp.lt.s32.totalorder %v471, %v472
    %v474 = vsel %vm473, %v471, %v472
    %v475 = vrot.slane %v474, 2
    %vm476 = vcmp.lt.s32.totalorder %v474, %v475
    %v477 = vsel %vm476, %v474, %v475
    %v478 = vrot.slane %v477, 1
    %vm479 = vcmp.lt.s32.totalorder %v477, %v478
    %v480 = vsel %vm479, %v477, %v478
    %v481 = vsel %vm407, %v465, 2147483647
    %v482 = vrot.slane %v481, 4
    %vm483 = vcmp.lt.s32.totalorder %v481, %v482
    %v484 = vsel %vm483, %v481, %v482
    %v485 = vrot.slane %v484, 2
    %vm486 = vcmp.lt.s32.totalorder %v484, %v485
    %v487 = vsel %vm486, %v484, %v485
    %v488 = vrot.slane %v487, 1
    %vm489 = vcmp.lt.s32.totalorder %v487, %v488
    %v490 = vsel %vm489, %v487, %v488
    %v491 = vsel %vm407, %v466, 2147483647
    %v492 = vrot.slane %v491, 4
    %vm493 = vcmp.lt.s32.totalorder %v491, %v492
    %v494 = vsel %vm493, %v491, %v492
    %v495 = vrot.slane %v494, 2
    %vm496 = vcmp.lt.s32.totalorder %v494, %v495
    %v497 = vsel %vm496, %v494, %v495
    %v498 = vrot.slane %v497, 1
    %vm499 = vcmp.lt.s32.totalorder %v497, %v498
    %v500 = vsel %vm499, %v497, %v498
    %v501 = vsel %vm407, %v467, 2147483647
    %v502 = vrot.slane %v501, 4
    %vm503 = vcmp.lt.s32.totalorder %v501, %v502
    %v504 = vsel %vm503, %v501, %v502
    %v505 = vrot.slane %v504, 2
    %vm506 = vcmp.lt.s32.totalorder %v504, %v505
    %v507 = vsel %vm506, %v504, %v505
    %v508 = vrot.slane %v507, 1
    %vm509 = vcmp.lt.s32.totalorder %v507, %v508
    %v510 = vsel %vm509, %v507, %v508
    %v511 = vsel %vm407, %v468, 2147483647
    %v512 = vrot.slane %v511, 4
    %vm513 = vcmp.lt.s32.totalorder %v511, %v512
    %v514 = vsel %vm513, %v511, %v512
    %v515 = vrot.slane %v514, 2
    %vm516 = vcmp.lt.s32.totalorder %v514, %v515
    %v517 = vsel %vm516, %v514, %v515
    %v518 = vrot.slane %v517, 1
    %vm519 = vcmp.lt.s32.totalorder %v517, %v518
    %v520 = vsel %vm519, %v517, %v518
    %v521 = vsel %vm407, %v469, 2147483647
    %v522 = vrot.slane %v521, 4
    %vm523 = vcmp.lt.s32.totalorder %v521, %v522
    %v524 = vsel %vm523, %v521, %v522
    %v525 = vrot.slane %v524, 2
    %vm526 = vcmp.lt.s32.totalorder %v524, %v525
    %v527 = vsel %vm526, %v524, %v525
    %v528 = vrot.slane %v527, 1
    %vm529 = vcmp.lt.s32.totalorder %v527, %v528
    %v530 = vsel %vm529, %v527, %v528
    %v531 = vsel %vm407, %v470, 2147483647
    %v532 = vrot.slane %v531, 4
    %vm533 = vcmp.lt.s32.totalorder %v531, %v532
    %v534 = vsel %vm533, %v531, %v532
    %v535 = vrot.slane %v534, 2
    %vm536 = vcmp.lt.s32.totalorder %v534, %v535
    %v537 = vsel %vm536, %v534, %v535
    %v538 = vrot.slane %v537, 1
    %vm539 = vcmp.lt.s32.totalorder %v537, %v538
    %v540 = vsel %vm539, %v537, %v538
    %vm541 = vcmask 1047557
    %v542 = vsel %vm541, %v68, -inf
    %v543 = vrot.slane %v542, 4
    %v544 = vmax.f32 %v542, %v543
    %v545 = vrot.slane %v544, 2
    %v546 = vmax.f32 %v544, %v545
    %v547 = vrot.slane %v546, 1
    %v548 = vmax.f32 %v546, %v547
    %v549 = vsel %vm541, %v92, -inf
    %v550 = vrot.slane %v549, 4
    %v551 = vmax.f32 %v549, %v550
    %v552 = vrot.slane %v551, 2
    %v553 = vmax.f32 %v551, %v552
    %v554 = vrot.slane %v553, 1
    %v555 = vmax.f32 %v553, %v554
    %v556 = vsel %vm541, %v116, -inf
    %v557 = vrot.slane %v556, 4
    %v558 = vmax.f32 %v556, %v557
    %v559 = vrot.slane %v558, 2
    %v560 = vmax.f32 %v558, %v559
    %v561 = vrot.slane %v560, 1
    %v562 = vmax.f32 %v560, %v561
    %v563 = vsel %vm541, %v141, -inf
    %v564 = vrot.slane %v563, 4
    %v565 = vmax.f32 %v563, %v564
    %v566 = vrot.slane %v565, 2
    %v567 = vmax.f32 %v565, %v566
    %v568 = vrot.slane %v567, 1
    %v569 = vmax.f32 %v567, %v568
    %v570 = vsel %vm541, %v174, -inf
    %v571 = vrot.slane %v570, 4
    %v572 = vmax.f32 %v570, %v571
    %v573 = vrot.slane %v572, 2
    %v574 = vmax.f32 %v572, %v573
    %v575 = vrot.slane %v574, 1
    %v576 = vmax.f32 %v574, %v575
    %v577 = vsel %vm541, %v198, -inf
    %v578 = vrot.slane %v577, 4
    %v579 = vmax.f32 %v577, %v578
    %v580 = vrot.slane %v579, 2
    %v581 = vmax.f32 %v579, %v580
    %v582 = vrot.slane %v581, 1
    %v583 = vmax.f32 %v581, %v582
    %v584 = vsel %vm541, %v222, -inf
    %v585 = vrot.slane %v584, 4
    %v586 = vmax.f32 %v584, %v585
    %v587 = vrot.slane %v586, 2
    %v588 = vmax.f32 %v586, %v587
    %v589 = vrot.slane %v588, 1
    %v590 = vmax.f32 %v588, %v589
    %vm591 = vcmp.eq.f32.partialorder %v68, %v548
    %vm592 = vcmp.eq.f32.partialorder %v92, %v555
    %vm593 = vcmp.eq.f32.partialorder %v116, %v562
    %vm594 = vcmp.eq.f32.partialorder %v141, %v569
    %vm595 = vcmp.eq.f32.partialorder %v174, %v576
    %vm596 = vcmp.eq.f32.partialorder %v198, %v583
    %vm597 = vcmp.eq.f32.partialorder %v222, %v590
    %v598 = vsel %vm591, %v259, 256
    %v599 = vsel %vm592, %v261, 256
    %v600 = vsel %vm593, %v263, 256
    %v601 = vsel %vm594, %v265, 256
    %v602 = vsel %vm595, %v267, 256
    %v603 = vsel %vm596, %v269, 256
    %v604 = vsel %vm597, %v271, 256
    %v605 = vsel %vm541, %v598, 2147483647
    %v606 = vrot.slane %v605, 4
    %vm607 = vcmp.lt.s32.totalorder %v605, %v606
    %v608 = vsel %vm607, %v605, %v606
    %v609 = vrot.slane %v608, 2
    %vm610 = vcmp.lt.s32.totalorder %v608, %v609
    %v611 = vsel %vm610, %v608, %v609
    %v612 = vrot.slane %v611, 1
    %vm613 = vcmp.lt.s32.totalorder %v611, %v612
    %v614 = vsel %vm613, %v611, %v612
    %v615 = vsel %vm541, %v599, 2147483647
    %v616 = vrot.slane %v615, 4
    %vm617 = vcmp.lt.s32.totalorder %v615, %v616
    %v618 = vsel %vm617, %v615, %v616
    %v619 = vrot.slane %v618, 2
    %vm620 = vcmp.lt.s32.totalorder %v618, %v619
    %v621 = vsel %vm620, %v618, %v619
    %v622 = vrot.slane %v621, 1
    %vm623 = vcmp.lt.s32.totalorder %v621, %v622
    %v624 = vsel %vm623, %v621, %v622
    %v625 = vsel %vm541, %v600, 2147483647
    %v626 = vrot.slane %v625, 4
    %vm627 = vcmp.lt.s32.totalorder %v625, %v626
    %v628 = vsel %vm627, %v625, %v626
    %v629 = vrot.slane %v628, 2
    %vm630 = vcmp.lt.s32.totalorder %v628, %v629
    %v631 = vsel %vm630, %v628, %v629
    %v632 = vrot.slane %v631, 1
    %vm633 = vcmp.lt.s32.totalorder %v631, %v632
    %v634 = vsel %vm633, %v631, %v632
    %v635 = vsel %vm541, %v601, 2147483647
    %v636 = vrot.slane %v635, 4
    %vm637 = vcmp.lt.s32.totalorder %v635, %v636
    %v638 = vsel %vm637, %v635, %v636
    %v639 = vrot.slane %v638, 2
    %vm640 = vcmp.lt.s32.totalorder %v638, %v639
    %v641 = vsel %vm640, %v638, %v639
    %v642 = vrot.slane %v641, 1
    %vm643 = vcmp.lt.s32.totalorder %v641, %v642
    %v644 = vsel %vm643, %v641, %v642
    %v645 = vsel %vm541, %v602, 2147483647
    %v646 = vrot.slane %v645, 4
    %vm647 = vcmp.lt.s32.totalorder %v645, %v646
    %v648 = vsel %vm647, %v645, %v646
    %v649 = vrot.slane %v648, 2
    %vm650 = vcmp.lt.s32.totalorder %v648, %v649
    %v651 = vsel %vm650, %v648, %v649
    %v652 = vrot.slane %v651, 1
    %vm653 = vcmp.lt.s32.totalorder %v651, %v652
    %v654 = vsel %vm653, %v651, %v652
    %v655 = vsel %vm541, %v603, 2147483647
    %v656 = vrot.slane %v655, 4
    %vm657 = vcmp.lt.s32.totalorder %v655, %v656
    %v658 = vsel %vm657, %v655, %v656
    %v659 = vrot.slane %v658, 2
    %vm660 = vcmp.lt.s32.totalorder %v658, %v659
    %v661 = vsel %vm660, %v658, %v659
    %v662 = vrot.slane %v661, 1
    %vm663 = vcmp.lt.s32.totalorder %v661, %v662
    %v664 = vsel %vm663, %v661, %v662
    %v665 = vsel %vm541, %v604, 2147483647
    %v666 = vrot.slane %v665, 4
    %vm667 = vcmp.lt.s32.totalorder %v665, %v666
    %v668 = vsel %vm667, %v665, %v666
    %v669 = vrot.slane %v668, 2
    %vm670 = vcmp.lt.s32.totalorder %v668, %v669
    %v671 = vsel %vm670, %v668, %v669
    %v672 = vrot.slane %v671, 1
    %vm673 = vcmp.lt.s32.totalorder %v671, %v672
    %v674 = vsel %vm673, %v671, %v672
    %v675 = vsel %vm273, %v70, -inf
    %v676 = vrot.slane %v675, 4
    %v677 = vmax.f32 %v675, %v676
    %v678 = vrot.slane %v677, 2
    %v679 = vmax.f32 %v677, %v678
    %v680 = vrot.slane %v679, 1
    %v681 = vmax.f32 %v679, %v680
    %v682 = vsel %vm273, %v94, -inf
    %v683 = vrot.slane %v682, 4
    %v684 = vmax.f32 %v682, %v683
    %v685 = vrot.slane %v684, 2
    %v686 = vmax.f32 %v684, %v685
    %v687 = vrot.slane %v686, 1
    %v688 = vmax.f32 %v686, %v687
    %v689 = vsel %vm273, %v118, -inf
    %v690 = vrot.slane %v689, 4
    %v691 = vmax.f32 %v689, %v690
    %v692 = vrot.slane %v691, 2
    %v693 = vmax.f32 %v691, %v692
    %v694 = vrot.slane %v693, 1
    %v695 = vmax.f32 %v693, %v694
    %v696 = vsel %vm273, %v144, -inf
    %v697 = vrot.slane %v696, 4
    %v698 = vmax.f32 %v696, %v697
    %v699 = vrot.slane %v698, 2
    %v700 = vmax.f32 %v698, %v699
    %v701 = vrot.slane %v700, 1
    %v702 = vmax.f32 %v700, %v701
    %v703 = vsel %vm273, %v176, -inf
    %v704 = vrot.slane %v703, 4
    %v705 = vmax.f32 %v703, %v704
    %v706 = vrot.slane %v705, 2
    %v707 = vmax.f32 %v705, %v706
    %v708 = vrot.slane %v707, 1
    %v709 = vmax.f32 %v707, %v708
    %v710 = vsel %vm273, %v200, -inf
    %v711 = vrot.slane %v710, 4
    %v712 = vmax.f32 %v710, %v711
    %v713 = vrot.slane %v712, 2
    %v714 = vmax.f32 %v712, %v713
    %v715 = vrot.slane %v714, 1
    %v716 = vmax.f32 %v714, %v715
    %v717 = vsel %vm273, %v224, -inf
    %v718 = vrot.slane %v717, 4
    %v719 = vmax.f32 %v717, %v718
    %v720 = vrot.slane %v719, 2
    %v721 = vmax.f32 %v719, %v720
    %v722 = vrot.slane %v721, 1
    %v723 = vmax.f32 %v721, %v722
    %vm724 = vcmp.eq.f32.partialorder %v70, %v681
    %vm725 = vcmp.eq.f32.partialorder %v94, %v688
    %vm726 = vcmp.eq.f32.partialorder %v118, %v695
    %vm727 = vcmp.eq.f32.partialorder %v144, %v702
    %vm728 = vcmp.eq.f32.partialorder %v176, %v709
    %vm729 = vcmp.eq.f32.partialorder %v200, %v716
    %vm730 = vcmp.eq.f32.partialorder %v224, %v723
    %v731 = vsel %vm724, %v260, 256
    %v732 = vsel %vm725, %v262, 256
    %v733 = vsel %vm726, %v264, 256
    %v734 = vsel %vm727, %v266, 256
    %v735 = vsel %vm728, %v268, 256
    %v736 = vsel %vm729, %v270, 256
    %v737 = vsel %vm730, %v272, 256
    %v738 = vsel %vm273, %v731, 2147483647
    %v739 = vrot.slane %v738, 4
    %vm740 = vcmp.lt.s32.totalorder %v738, %v739
    %v741 = vsel %vm740, %v738, %v739
    %v742 = vrot.slane %v741, 2
    %vm743 = vcmp.lt.s32.totalorder %v741, %v742
    %v744 = vsel %vm743, %v741, %v742
    %v745 = vrot.slane %v744, 1
    %vm746 = vcmp.lt.s32.totalorder %v744, %v745
    %v747 = vsel %vm746, %v744, %v745
    %v748 = vsel %vm273, %v732, 2147483647
    %v749 = vrot.slane %v748, 4
    %vm750 = vcmp.lt.s32.totalorder %v748, %v749
    %v751 = vsel %vm750, %v748, %v749
    %v752 = vrot.slane %v751, 2
    %vm753 = vcmp.lt.s32.totalorder %v751, %v752
    %v754 = vsel %vm753, %v751, %v752
    %v755 = vrot.slane %v754, 1
    %vm756 = vcmp.lt.s32.totalorder %v754, %v755
    %v757 = vsel %vm756, %v754, %v755
    %v758 = vsel %vm273, %v733, 2147483647
    %v759 = vrot.slane %v758, 4
    %vm760 = vcmp.lt.s32.totalorder %v758, %v759
    %v761 = vsel %vm760, %v758, %v759
    %v762 = vrot.slane %v761, 2
    %vm763 = vcmp.lt.s32.totalorder %v761, %v762
    %v764 = vsel %vm763, %v761, %v762
    %v765 = vrot.slane %v764, 1
    %vm766 = vcmp.lt.s32.totalorder %v764, %v765
    %v767 = vsel %vm766, %v764, %v765
    %v768 = vsel %vm273, %v734, 2147483647
    %v769 = vrot.slane %v768, 4
    %vm770 = vcmp.lt.s32.totalorder %v768, %v769
    %v771 = vsel %vm770, %v768, %v769
    %v772 = vrot.slane %v771, 2
    %vm773 = vcmp.lt.s32.totalorder %v771, %v772
    %v774 = vsel %vm773, %v771, %v772
    %v775 = vrot.slane %v774, 1
    %vm776 = vcmp.lt.s32.totalorder %v774, %v775
    %v777 = vsel %vm776, %v774, %v775
    %v778 = vsel %vm273, %v735, 2147483647
    %v779 = vrot.slane %v778, 4
    %vm780 = vcmp.lt.s32.totalorder %v778, %v779
    %v781 = vsel %vm780, %v778, %v779
    %v782 = vrot.slane %v781, 2
    %vm783 = vcmp.lt.s32.totalorder %v781, %v782
    %v784 = vsel %vm783, %v781, %v782
    %v785 = vrot.slane %v784, 1
    %vm786 = vcmp.lt.s32.totalorder %v784, %v785
    %v787 = vsel %vm786, %v784, %v785
    %v788 = vsel %vm273, %v736, 2147483647
    %v789 = vrot.slane %v788, 4
    %vm790 = vcmp.lt.s32.totalorder %v788, %v789
    %v791 = vsel %vm790, %v788, %v789
    %v792 = vrot.slane %v791, 2
    %vm793 = vcmp.lt.s32.totalorder %v791, %v792
    %v794 = vsel %vm793, %v791, %v792
    %v795 = vrot.slane %v794, 1
    %vm796 = vcmp.lt.s32.totalorder %v794, %v795
    %v797 = vsel %vm796, %v794, %v795
    %v798 = vsel %vm273, %v737, 2147483647
    %v799 = vrot.slane %v798, 4
    %vm800 = vcmp.lt.s32.totalorder %v798, %v799
    %v801 = vsel %vm800, %v798, %v799
    %v802 = vrot.slane %v801, 2
    %vm803 = vcmp.lt.s32.totalorder %v801, %v802
    %v804 = vsel %vm803, %v801, %v802
    %v805 = vrot.slane %v804, 1
    %vm806 = vcmp.lt.s32.totalorder %v804, %v805
    %v807 = vsel %vm806, %v804, %v805
    %v808 = vsel %vm407, %v70, -inf
    %v809 = vrot.slane %v808, 4
    %v810 = vmax.f32 %v808, %v809
    %v811 = vrot.slane %v810, 2
    %v812 = vmax.f32 %v810, %v811
    %v813 = vrot.slane %v812, 1
    %v814 = vmax.f32 %v812, %v813
    %v815 = vsel %vm407, %v94, -inf
    %v816 = vrot.slane %v815, 4
    %v817 = vmax.f32 %v815, %v816
    %v818 = vrot.slane %v817, 2
    %v819 = vmax.f32 %v817, %v818
    %v820 = vrot.slane %v819, 1
    %v821 = vmax.f32 %v819, %v820
    %v822 = vsel %vm407, %v118, -inf
    %v823 = vrot.slane %v822, 4
    %v824 = vmax.f32 %v822, %v823
    %v825 = vrot.slane %v824, 2
    %v826 = vmax.f32 %v824, %v825
    %v827 = vrot.slane %v826, 1
    %v828 = vmax.f32 %v826, %v827
    %v829 = vsel %vm407, %v144, -inf
    %v830 = vrot.slane %v829, 4
    %v831 = vmax.f32 %v829, %v830
    %v832 = vrot.slane %v831, 2
    %v833 = vmax.f32 %v831, %v832
    %v834 = vrot.slane %v833, 1
    %v835 = vmax.f32 %v833, %v834
    %v836 = vsel %vm407, %v176, -inf
    %v837 = vrot.slane %v836, 4
    %v838 = vmax.f32 %v836, %v837
    %v839 = vrot.slane %v838, 2
    %v840 = vmax.f32 %v838, %v839
    %v841 = vrot.slane %v840, 1
    %v842 = vmax.f32 %v840, %v841
    %v843 = vsel %vm407, %v200, -inf
    %v844 = vrot.slane %v843, 4
    %v845 = vmax.f32 %v843, %v844
    %v846 = vrot.slane %v845, 2
    %v847 = vmax.f32 %v845, %v846
    %v848 = vrot.slane %v847, 1
    %v849 = vmax.f32 %v847, %v848
    %v850 = vsel %vm407, %v224, -inf
    %v851 = vrot.slane %v850, 4
    %v852 = vmax.f32 %v850, %v851
    %v853 = vrot.slane %v852, 2
    %v854 = vmax.f32 %v852, %v853
    %v855 = vrot.slane %v854, 1
    %v856 = vmax.f32 %v854, %v855
    %vm857 = vcmp.eq.f32.partialorder %v70, %v814
    %vm858 = vcmp.eq.f32.partialorder %v94, %v821
    %vm859 = vcmp.eq.f32.partialorder %v118, %v828
    %vm860 = vcmp.eq.f32.partialorder %v144, %v835
    %vm861 = vcmp.eq.f32.partialorder %v176, %v842
    %vm862 = vcmp.eq.f32.partialorder %v200, %v849
    %vm863 = vcmp.eq.f32.partialorder %v224, %v856
    %v864 = vsel %vm857, %v260, 256
    %v865 = vsel %vm858, %v262, 256
    %v866 = vsel %vm859, %v264, 256
    %v867 = vsel %vm860, %v266, 256
    %v868 = vsel %vm861, %v268, 256
    %v869 = vsel %vm862, %v270, 256
    %v870 = vsel %vm863, %v272, 256
    %v871 = vsel %vm407, %v864, 2147483647
    %v872 = vrot.slane %v871, 4
    %vm873 = vcmp.lt.s32.totalorder %v871, %v872
    %v874 = vsel %vm873, %v871, %v872
    %v875 = vrot.slane %v874, 2
    %vm876 = vcmp.lt.s32.totalorder %v874, %v875
    %v877 = vsel %vm876, %v874, %v875
    %v878 = vrot.slane %v877, 1
    %vm879 = vcmp.lt.s32.totalorder %v877, %v878
    %v880 = vsel %vm879, %v877, %v878
    %v881 = vsel %vm407, %v865, 2147483647
    %v882 = vrot.slane %v881, 4
    %vm883 = vcmp.lt.s32.totalorder %v881, %v882
    %v884 = vsel %vm883, %v881, %v882
    %v885 = vrot.slane %v884, 2
    %vm886 = vcmp.lt.s32.totalorder %v884, %v885
    %v887 = vsel %vm886, %v884, %v885
    %v888 = vrot.slane %v887, 1
    %vm889 = vcmp.lt.s32.totalorder %v887, %v888
    %v890 = vsel %vm889, %v887, %v888
    %v891 = vsel %vm407, %v866, 2147483647
    %v892 = vrot.slane %v891, 4
    %vm893 = vcmp.lt.s32.totalorder %v891, %v892
    %v894 = vsel %vm893, %v891, %v892
    %v895 = vrot.slane %v894, 2
    %vm896 = vcmp.lt.s32.totalorder %v894, %v895
    %v897 = vsel %vm896, %v894, %v895
    %v898 = vrot.slane %v897, 1
    %vm899 = vcmp.lt.s32.totalorder %v897, %v898
    %v900 = vsel %vm899, %v897, %v898
    %v901 = vsel %vm407, %v867, 2147483647
    %v902 = vrot.slane %v901, 4
    %vm903 = vcmp.lt.s32.totalorder %v901, %v902
    %v904 = vsel %vm903, %v901, %v902
    %v905 = vrot.slane %v904, 2
    %vm906 = vcmp.lt.s32.totalorder %v904, %v905
    %v907 = vsel %vm906, %v904, %v905
    %v908 = vrot.slane %v907, 1
    %vm909 = vcmp.lt.s32.totalorder %v907, %v908
    %v910 = vsel %vm909, %v907, %v908
    %v911 = vsel %vm407, %v868, 2147483647
    %v912 = vrot.slane %v911, 4
    %vm913 = vcmp.lt.s32.totalorder %v911, %v912
    %v914 = vsel %vm913, %v911, %v912
    %v915 = vrot.slane %v914, 2
    %vm916 = vcmp.lt.s32.totalorder %v914, %v915
    %v917 = vsel %vm916, %v914, %v915
    %v918 = vrot.slane %v917, 1
    %vm919 = vcmp.lt.s32.totalorder %v917, %v918
    %v920 = vsel %vm919, %v917, %v918
    %v921 = vsel %vm407, %v869, 2147483647
    %v922 = vrot.slane %v921, 4
    %vm923 = vcmp.lt.s32.totalorder %v921, %v922
    %v924 = vsel %vm923, %v921, %v922
    %v925 = vrot.slane %v924, 2
    %vm926 = vcmp.lt.s32.totalorder %v924, %v925
    %v927 = vsel %vm926, %v924, %v925
    %v928 = vrot.slane %v927, 1
    %vm929 = vcmp.lt.s32.totalorder %v927, %v928
    %v930 = vsel %vm929, %v927, %v928
    %v931 = vsel %vm407, %v870, 2147483647
    %v932 = vrot.slane %v931, 4
    %vm933 = vcmp.lt.s32.totalorder %v931, %v932
    %v934 = vsel %vm933, %v931, %v932
    %v935 = vrot.slane %v934, 2
    %vm936 = vcmp.lt.s32.totalorder %v934, %v935
    %v937 = vsel %vm936, %v934, %v935
    %v938 = vrot.slane %v937, 1
    %vm939 = vcmp.lt.s32.totalorder %v937, %v938
    %v940 = vsel %vm939, %v937, %v938
    %v941 = vsel %vm541, %v70, -inf
    %v942 = vrot.slane %v941, 4
    %v943 = vmax.f32 %v941, %v942
    %v944 = vrot.slane %v943, 2
    %v945 = vmax.f32 %v943, %v944
    %v946 = vrot.slane %v945, 1
    %v947 = vmax.f32 %v945, %v946
    %v948 = vsel %vm541, %v94, -inf
    %v949 = vrot.slane %v948, 4
    %v950 = vmax.f32 %v948, %v949
    %v951 = vrot.slane %v950, 2
    %v952 = vmax.f32 %v950, %v951
    %v953 = vrot.slane %v952, 1
    %v954 = vmax.f32 %v952, %v953
    %v955 = vsel %vm541, %v118, -inf
    %v956 = vrot.slane %v955, 4
    %v957 = vmax.f32 %v955, %v956
    %v958 = vrot.slane %v957, 2
    %v959 = vmax.f32 %v957, %v958
    %v960 = vrot.slane %v959, 1
    %v961 = vmax.f32 %v959, %v960
    %v962 = vsel %vm541, %v144, -inf
    %v963 = vrot.slane %v962, 4
    %v964 = vmax.f32 %v962, %v963
    %v965 = vrot.slane %v964, 2
    %v966 = vmax.f32 %v964, %v965
    %v967 = vrot.slane %v966, 1
    %v968 = vmax.f32 %v966, %v967
    %v969 = vsel %vm541, %v176, -inf
    %v970 = vrot.slane %v969, 4
    %v971 = vmax.f32 %v969, %v970
    %v972 = vrot.slane %v971, 2
    %v973 = vmax.f32 %v971, %v972
    %v974 = vrot.slane %v973, 1
    %v975 = vmax.f32 %v973, %v974
    %v976 = vsel %vm541, %v200, -inf
    %v977 = vrot.slane %v976, 4
    %v978 = vmax.f32 %v976, %v977
    %v979 = vrot.slane %v978, 2
    %v980 = vmax.f32 %v978, %v979
    %v981 = vrot.slane %v980, 1
    %v982 = vmax.f32 %v980, %v981
    %v983 = vsel %vm541, %v224, -inf
    %v984 = vrot.slane %v983, 4
    %v985 = vmax.f32 %v983, %v984
    %v986 = vrot.slane %v985, 2
    %v987 = vmax.f32 %v985, %v986
    %v988 = vrot.slane %v987, 1
    %v989 = vmax.f32 %v987, %v988
    %vm990 = vcmp.eq.f32.partialorder %v70, %v947
    %vm991 = vcmp.eq.f32.partialorder %v94, %v954
    %vm992 = vcmp.eq.f32.partialorder %v118, %v961
    %vm993 = vcmp.eq.f32.partialorder %v144, %v968
    %vm994 = vcmp.eq.f32.partialorder %v176, %v975
    %vm995 = vcmp.eq.f32.partialorder %v200, %v982
    %vm996 = vcmp.eq.f32.partialorder %v224, %v989
    %v997 = vsel %vm990, %v260, 256
    %v998 = vsel %vm991, %v262, 256
    %v999 = vsel %vm992, %v264, 256
    %v1000 = vsel %vm993, %v266, 256
    %v1001 = vsel %vm994, %v268, 256
    %v1002 = vsel %vm995, %v270, 256
    %v1003 = vsel %vm996, %v272, 256
    %v1004 = vsel %vm541, %v997, 2147483647
    %v1005 = vrot.slane %v1004, 4
    %vm1006 = vcmp.lt.s32.totalorder %v1004, %v1005
    %v1007 = vsel %vm1006, %v1004, %v1005
    %v1008 = vrot.slane %v1007, 2
    %vm1009 = vcmp.lt.s32.totalorder %v1007, %v1008
    %v1010 = vsel %vm1009, %v1007, %v1008
    %v1011 = vrot.slane %v1010, 1
    %vm1012 = vcmp.lt.s32.totalorder %v1010, %v1011
    %v1013 = vsel %vm1012, %v1010, %v1011
    %v1014 = vsel %vm541, %v998, 2147483647
    %v1015 = vrot.slane %v1014, 4
    %vm1016 = vcmp.lt.s32.totalorder %v1014, %v1015
    %v1017 = vsel %vm1016, %v1014, %v1015
    %v1018 = vrot.slane %v1017, 2
    %vm1019 = vcmp.lt.s32.totalorder %v1017, %v1018
    %v1020 = vsel %vm1019, %v1017, %v1018
    %v1021 = vrot.slane %v1020, 1
    %vm1022 = vcmp.lt.s32.totalorder %v1020, %v1021
    %v1023 = vsel %vm1022, %v1020, %v1021
    %v1024 = vsel %vm541, %v999, 2147483647
    %v1025 = vrot.slane %v1024, 4
    %vm1026 = vcmp.lt.s32.totalorder %v1024, %v1025
    %v1027 = vsel %vm1026, %v1024, %v1025
    %v1028 = vrot.slane %v1027, 2
    %vm1029 = vcmp.lt.s32.totalorder %v1027, %v1028
    %v1030 = vsel %vm1029, %v1027, %v1028
    %v1031 = vrot.slane %v1030, 1
    %vm1032 = vcmp.lt.s32.totalorder %v1030, %v1031
    %v1033 = vsel %vm1032, %v1030, %v1031
    %v1034 = vsel %vm541, %v1000, 2147483647
    %v1035 = vrot.slane %v1034, 4
    %vm1036 = vcmp.lt.s32.totalorder %v1034, %v1035
    %v1037 = vsel %vm1036, %v1034, %v1035
    %v1038 = vrot.slane %v1037, 2
    %vm1039 = vcmp.lt.s32.totalorder %v1037, %v1038
    %v1040 = vsel %vm1039, %v1037, %v1038
    %v1041 = vrot.slane %v1040, 1
    %vm1042 = vcmp.lt.s32.totalorder %v1040, %v1041
    %v1043 = vsel %vm1042, %v1040, %v1041
    %v1044 = vsel %vm541, %v1001, 2147483647
    %v1045 = vrot.slane %v1044, 4
    %vm1046 = vcmp.lt.s32.totalorder %v1044, %v1045
    %v1047 = vsel %vm1046, %v1044, %v1045
    %v1048 = vrot.slane %v1047, 2
    %vm1049 = vcmp.lt.s32.totalorder %v1047, %v1048
    %v1050 = vsel %vm1049, %v1047, %v1048
    %v1051 = vrot.slane %v1050, 1
    %vm1052 = vcmp.lt.s32.totalorder %v1050, %v1051
    %v1053 = vsel %vm1052, %v1050, %v1051
    %v1054 = vsel %vm541, %v1002, 2147483647
    %v1055 = vrot.slane %v1054, 4
    %vm1056 = vcmp.lt.s32.totalorder %v1054, %v1055
    %v1057 = vsel %vm1056, %v1054, %v1055
    %v1058 = vrot.slane %v1057, 2
    %vm1059 = vcmp.lt.s32.totalorder %v1057, %v1058
    %v1060 = vsel %vm1059, %v1057, %v1058
    %v1061 = vrot.slane %v1060, 1
    %vm1062 = vcmp.lt.s32.totalorder %v1060, %v1061
    %v1063 = vsel %vm1062, %v1060, %v1061
    %v1064 = vsel %vm541, %v1003, 2147483647
    %v1065 = vrot.slane %v1064, 4
    %vm1066 = vcmp.lt.s32.totalorder %v1064, %v1065
    %v1067 = vsel %vm1066, %v1064, %v1065
    %v1068 = vrot.slane %v1067, 2
    %vm1069 = vcmp.lt.s32.totalorder %v1067, %v1068
    %v1070 = vsel %vm1069, %v1067, %v1068
    %v1071 = vrot.slane %v1070, 1
    %vm1072 = vcmp.lt.s32.totalorder %v1070, %v1071
    %v1073 = vsel %vm1072, %v1070, %v1071
    %v1116 = vrot.slane %v287, 7
    %vm1117 = vcmask 1041409
    %v1118 = vsel %vm1117, %v1116, %v280
    %v1119 = vrot.slane %v294, 6
    %vm1120 = vcmask 1042434
    %v1121 = vsel %vm1120, %v1119, %v1118
    %v1122 = vrot.slane %v301, 5
    %vm1123 = vcmask 1043459
    %v1124 = vsel %vm1123, %v1122, %v1121
    %v1125 = vrot.slane %v308, 4
    %vm1126 = vcmask 1044484
    %v1127 = vsel %vm1126, %v1125, %v1124
    %v1128 = vrot.slane %v315, 3
    %vm1129 = vcmask 1045509
    %v1130 = vsel %vm1129, %v1128, %v1127
    %v1131 = vrot.slane %v322, 2
    %vm1132 = vcmask 1046534
    %v1133 = vsel %vm1132, %v1131, %v1130
    %v1134 = vrot.slane %v421, 7
    %v1135 = vsel %vm1117, %v1134, %v414
    %v1136 = vrot.slane %v428, 6
    %v1137 = vsel %vm1120, %v1136, %v1135
    %v1138 = vrot.slane %v435, 5
    %v1139 = vsel %vm1123, %v1138, %v1137
    %v1140 = vrot.slane %v442, 4
    %v1141 = vsel %vm1126, %v1140, %v1139
    %v1142 = vrot.slane %v449, 3
    %v1143 = vsel %vm1129, %v1142, %v1141
    %v1144 = vrot.slane %v456, 2
    %v1145 = vsel %vm1132, %v1144, %v1143
    %v1146 = vrot.slane %v555, 7
    %v1147 = vsel %vm1117, %v1146, %v548
    %v1148 = vrot.slane %v562, 6
    %v1149 = vsel %vm1120, %v1148, %v1147
    %v1150 = vrot.slane %v569, 5
    %v1151 = vsel %vm1123, %v1150, %v1149
    %v1152 = vrot.slane %v576, 4
    %v1153 = vsel %vm1126, %v1152, %v1151
    %v1154 = vrot.slane %v583, 3
    %v1155 = vsel %vm1129, %v1154, %v1153
    %v1156 = vrot.slane %v590, 2
    %v1157 = vsel %vm1132, %v1156, %v1155
    %v1158 = vrot.slane %v688, 7
    %v1159 = vsel %vm1117, %v1158, %v681
    %v1160 = vrot.slane %v695, 6
    %v1161 = vsel %vm1120, %v1160, %v1159
    %v1162 = vrot.slane %v702, 5
    %v1163 = vsel %vm1123, %v1162, %v1161
    %v1164 = vrot.slane %v709, 4
    %v1165 = vsel %vm1126, %v1164, %v1163
    %v1166 = vrot.slane %v716, 3
    %v1167 = vsel %vm1129, %v1166, %v1165
    %v1168 = vrot.slane %v723, 2
    %v1169 = vsel %vm1132, %v1168, %v1167
    %v1170 = vrot.slane %v821, 7
    %v1171 = vsel %vm1117, %v1170, %v814
    %v1172 = vrot.slane %v828, 6
    %v1173 = vsel %vm1120, %v1172, %v1171
    %v1174 = vrot.slane %v835, 5
    %v1175 = vsel %vm1123, %v1174, %v1173
    %v1176 = vrot.slane %v842, 4
    %v1177 = vsel %vm1126, %v1176, %v1175
    %v1178 = vrot.slane %v849, 3
    %v1179 = vsel %vm1129, %v1178, %v1177
    %v1180 = vrot.slane %v856, 2
    %v1181 = vsel %vm1132, %v1180, %v1179
    %v1182 = vrot.slane %v954, 7
    %v1183 = vsel %vm1117, %v1182, %v947
    %v1184 = vrot.slane %v961, 6
    %v1185 = vsel %vm1120, %v1184, %v1183
    %v1186 = vrot.slane %v968, 5
    %v1187 = vsel %vm1123, %v1186, %v1185
    %v1188 = vrot.slane %v975, 4
    %v1189 = vsel %vm1126, %v1188, %v1187
    %v1190 = vrot.slane %v982, 3
    %v1191 = vsel %vm1129, %v1190, %v1189
    %v1192 = vrot.slane %v989, 2
    %v1193 = vsel %vm1132, %v1192, %v1191
    %1200 = vst [vmem:[#allocation5] sm:$0x7f] %v1133
    %1201 = vst [vmem:[#allocation5 + $0x8] sm:$0x7f] %v1145
    %1202 = vst [vmem:[#allocation5 + $0x10] sm:$0x7f] %v1157
    %1203 = vst [vmem:[#allocation5 + $0x18] sm:$0x7f] %v1169
    %1204 = vst [vmem:[#allocation5 + $0x20] sm:$0x7f] %v1181
    %1205 = vst [vmem:[#allocation5 + $0x28] sm:$0x7f] %v1193
    %v1206 = vrot.slane %v356, 7
    %v1207 = vsel %vm1117, %v1206, %v346
    %v1208 = vrot.slane %v366, 6
    %v1209 = vsel %vm1120, %v1208, %v1207
    %v1210 = vrot.slane %v376, 5
    %v1211 = vsel %vm1123, %v1210, %v1209
    %v1212 = vrot.slane %v386, 4
    %v1213 = vsel %vm1126, %v1212, %v1211
    %v1214 = vrot.slane %v396, 3
    %v1215 = vsel %vm1129, %v1214, %v1213
    %v1216 = vrot.slane %v406, 2
    %v1217 = vsel %vm1132, %v1216, %v1215
    %v1218 = vrot.slane %v490, 7
    %v1219 = vsel %vm1117, %v1218, %v480
    %v1220 = vrot.slane %v500, 6
    %v1221 = vsel %vm1120, %v1220, %v1219
    %v1222 = vrot.slane %v510, 5
    %v1223 = vsel %vm1123, %v1222, %v1221
    %v1224 = vrot.slane %v520, 4
    %v1225 = vsel %vm1126, %v1224, %v1223
    %v1226 = vrot.slane %v530, 3
    %v1227 = vsel %vm1129, %v1226, %v1225
    %v1228 = vrot.slane %v540, 2
    %v1229 = vsel %vm1132, %v1228, %v1227
    %v1230 = vrot.slane %v624, 7
    %v1231 = vsel %vm1117, %v1230, %v614
    %v1232 = vrot.slane %v634, 6
    %v1233 = vsel %vm1120, %v1232, %v1231
    %v1234 = vrot.slane %v644, 5
    %v1235 = vsel %vm1123, %v1234, %v1233
    %v1236 = vrot.slane %v654, 4
    %v1237 = vsel %vm1126, %v1236, %v1235
    %v1238 = vrot.slane %v664, 3
    %v1239 = vsel %vm1129, %v1238, %v1237
    %v1240 = vrot.slane %v674, 2
    %v1241 = vsel %vm1132, %v1240, %v1239
    %v1242 = vrot.slane %v757, 7
    %v1243 = vsel %vm1117, %v1242, %v747
    %v1244 = vrot.slane %v767, 6
    %v1245 = vsel %vm1120, %v1244, %v1243
    %v1246 = vrot.slane %v777, 5
    %v1247 = vsel %vm1123, %v1246, %v1245
    %v1248 = vrot.slane %v787, 4
    %v1249 = vsel %vm1126, %v1248, %v1247
    %v1250 = vrot.slane %v797, 3
    %v1251 = vsel %vm1129, %v1250, %v1249
    %v1252 = vrot.slane %v807, 2
    %v1253 = vsel %vm1132, %v1252, %v1251
    %v1254 = vrot.slane %v890, 7
    %v1255 = vsel %vm1117, %v1254, %v880
    %v1256 = vrot.slane %v900, 6
    %v1257 = vsel %vm1120, %v1256, %v1255
    %v1258 = vrot.slane %v910, 5
    %v1259 = vsel %vm1123, %v1258, %v1257
    %v1260 = vrot.slane %v920, 4
    %v1261 = vsel %vm1126, %v1260, %v1259
    %v1262 = vrot.slane %v930, 3
    %v1263 = vsel %vm1129, %v1262, %v1261
    %v1264 = vrot.slane %v940, 2
    %v1265 = vsel %vm1132, %v1264, %v1263
    %v1266 = vrot.slane %v1023, 7
    %v1267 = vsel %vm1117, %v1266, %v1013
    %v1268 = vrot.slane %v1033, 6
    %v1269 = vsel %vm1120, %v1268, %v1267
    %v1270 = vrot.slane %v1043, 5
    %v1271 = vsel %vm1123, %v1270, %v1269
    %v1272 = vrot.slane %v1053, 4
    %v1273 = vsel %vm1126, %v1272, %v1271
    %v1274 = vrot.slane %v1063, 3
    %v1275 = vsel %vm1129, %v1274, %v1273
    %v1276 = vrot.slane %v1073, 2
    %v1277 = vsel %vm1132, %v1276, %v1275
    %1278 = vst [vmem:[#allocation6] sm:$0x7f] %v1217
    %1279 = vst [vmem:[#allocation6 + $0x8] sm:$0x7f] %v1229
    %1280 = vst [vmem:[#allocation6 + $0x10] sm:$0x7f] %v1241
    %1281 = vst [vmem:[#allocation6 + $0x18] sm:$0x7f] %v1253
    %1282 = vst [vmem:[#allocation6 + $0x20] sm:$0x7f] %v1265
    %1283 = vst [vmem:[#allocation6 + $0x28] sm:$0x7f] %v1277
    %vm1284 = vcmask 1040384
    %v1285 = vsel %vm1284, %v280, -inf
    %v1286 = vsel %vm1284, %v414, -inf
    %v1287 = vmax.f32 %v1285, %v1286
    %v1288 = vsel %vm1284, %v548, -inf
    %v1289 = vmax.f32 %v1287, %v1288
    %v1290 = vsel %vm1284, %v681, -inf
    %v1291 = vmax.f32 %v1289, %v1290
    %v1292 = vsel %vm1284, %v814, -inf
    %v1293 = vmax.f32 %v1291, %v1292
    %v1294 = vsel %vm1284, %v947, -inf
    %v1295 = vmax.f32 %v1293, %v1294
    %v1296 = vsel %vm1284, %v287, -inf
    %v1297 = vsel %vm1284, %v421, -inf
    %v1298 = vmax.f32 %v1296, %v1297
    %v1299 = vsel %vm1284, %v555, -inf
    %v1300 = vmax.f32 %v1298, %v1299
    %v1301 = vsel %vm1284, %v688, -inf
    %v1302 = vmax.f32 %v1300, %v1301
    %v1303 = vsel %vm1284, %v821, -inf
    %v1304 = vmax.f32 %v1302, %v1303
    %v1305 = vsel %vm1284, %v954, -inf
    %v1306 = vmax.f32 %v1304, %v1305
    %v1307 = vsel %vm1284, %v294, -inf
    %v1308 = vsel %vm1284, %v428, -inf
    %v1309 = vmax.f32 %v1307, %v1308
    %v1310 = vsel %vm1284, %v562, -inf
    %v1311 = vmax.f32 %v1309, %v1310
    %v1312 = vsel %vm1284, %v695, -inf
    %v1313 = vmax.f32 %v1311, %v1312
    %v1314 = vsel %vm1284, %v828, -inf
    %v1315 = vmax.f32 %v1313, %v1314
    %v1316 = vsel %vm1284, %v961, -inf
    %v1317 = vmax.f32 %v1315, %v1316
    %v1318 = vsel %vm1284, %v301, -inf
    %v1319 = vsel %vm1284, %v435, -inf
    %v1320 = vmax.f32 %v1318, %v1319
    %v1321 = vsel %vm1284, %v569, -inf
    %v1322 = vmax.f32 %v1320, %v1321
    %v1323 = vsel %vm1284, %v702, -inf
    %v1324 = vmax.f32 %v1322, %v1323
    %v1325 = vsel %vm1284, %v835, -inf
    %v1326 = vmax.f32 %v1324, %v1325
    %v1327 = vsel %vm1284, %v968, -inf
    %v1328 = vmax.f32 %v1326, %v1327
    %v1329 = vsel %vm1284, %v308, -inf
    %v1330 = vsel %vm1284, %v442, -inf
    %v1331 = vmax.f32 %v1329, %v1330
    %v1332 = vsel %vm1284, %v576, -inf
    %v1333 = vmax.f32 %v1331, %v1332
    %v1334 = vsel %vm1284, %v709, -inf
    %v1335 = vmax.f32 %v1333, %v1334
    %v1336 = vsel %vm1284, %v842, -inf
    %v1337 = vmax.f32 %v1335, %v1336
    %v1338 = vsel %vm1284, %v975, -inf
    %v1339 = vmax.f32 %v1337, %v1338
    %v1340 = vsel %vm1284, %v315, -inf
    %v1341 = vsel %vm1284, %v449, -inf
    %v1342 = vmax.f32 %v1340, %v1341
    %v1343 = vsel %vm1284, %v583, -inf
    %v1344 = vmax.f32 %v1342, %v1343
    %v1345 = vsel %vm1284, %v716, -inf
    %v1346 = vmax.f32 %v1344, %v1345
    %v1347 = vsel %vm1284, %v849, -inf
    %v1348 = vmax.f32 %v1346, %v1347
    %v1349 = vsel %vm1284, %v982, -inf
    %v1350 = vmax.f32 %v1348, %v1349
    %v1351 = vsel %vm1284, %v322, -inf
    %v1352 = vsel %vm1284, %v456, -inf
    %v1353 = vmax.f32 %v1351, %v1352
    %v1354 = vsel %vm1284, %v590, -inf
    %v1355 = vmax.f32 %v1353, %v1354
    %v1356 = vsel %vm1284, %v723, -inf
    %v1357 = vmax.f32 %v1355, %v1356
    %v1358 = vsel %vm1284, %v856, -inf
    %v1359 = vmax.f32 %v1357, %v1358
    %v1360 = vsel %vm1284, %v989, -inf
    %v1361 = vmax.f32 %v1359, %v1360
    %v1362 = vsel %vm1284, %v1295, -inf
    %v1363 = vsel %vm1284, %v1306, -inf
    %v1364 = vsel %vm1284, %v1317, -inf
    %v1365 = vsel %vm1284, %v1328, -inf
    %v1366 = vsel %vm1284, %v1339, -inf
    %v1367 = vmax.f32 %v1362, %v1366
    %v1368 = vsel %vm1284, %v1350, -inf
    %v1369 = vmax.f32 %v1363, %v1368
    %v1370 = vsel %vm1284, %v1361, -inf
    %v1371 = vmax.f32 %v1364, %v1370
    %v1372 = vmax.f32 %v1367, %v1369
    %v1373 = vmax.f32 %v1371, %v1365
    %v1374 = vmax.f32 %v1372, %v1373
    %1375 = vst [vmem:[#allocation8] sm:$0x1] %v1374
    %vm1376 = vcmask 1045504
    %v1377 = vsel %vm1376, %v32, -inf
    %v1378 = vrot.slane %v1377, 4
    %v1379 = vmax.f32 %v1377, %v1378
    %v1380 = vrot.slane %v1379, 2
    %v1381 = vmax.f32 %v1379, %v1380
    %v1382 = vrot.slane %v1381, 1
    %v1383 = vmax.f32 %v1381, %v1382
    %v1384 = vsel %vm1376, %v34, -inf
    %v1385 = vrot.slane %v1384, 4
    %v1386 = vmax.f32 %v1384, %v1385
    %v1387 = vrot.slane %v1386, 2
    %v1388 = vmax.f32 %v1386, %v1387
    %v1389 = vrot.slane %v1388, 1
    %v1390 = vmax.f32 %v1388, %v1389
    %v1391 = vsel %vm1376, %v36, -inf
    %v1392 = vrot.slane %v1391, 4
    %v1393 = vmax.f32 %v1391, %v1392
    %v1394 = vrot.slane %v1393, 2
    %v1395 = vmax.f32 %v1393, %v1394
    %v1396 = vrot.slane %v1395, 1
    %v1397 = vmax.f32 %v1395, %v1396
    %v1398 = vsel %vm1376, %v38, -inf
    %v1399 = vrot.slane %v1398, 4
    %v1400 = vmax.f32 %v1398, %v1399
    %v1401 = vrot.slane %v1400, 2
    %v1402 = vmax.f32 %v1400, %v1401
    %v1403 = vrot.slane %v1402, 1
    %v1404 = vmax.f32 %v1402, %v1403
    %v1405 = vsel %vm1376, %v40, -inf
    %v1406 = vrot.slane %v1405, 4
    %v1407 = vmax.f32 %v1405, %v1406
    %v1408 = vrot.slane %v1407, 2
    %v1409 = vmax.f32 %v1407, %v1408
    %v1410 = vrot.slane %v1409, 1
    %v1411 = vmax.f32 %v1409, %v1410
    %v1412 = vsel %vm1376, %v42, -inf
    %v1413 = vrot.slane %v1412, 4
    %v1414 = vmax.f32 %v1412, %v1413
    %v1415 = vrot.slane %v1414, 2
    %v1416 = vmax.f32 %v1414, %v1415
    %v1417 = vrot.slane %v1416, 1
    %v1418 = vmax.f32 %v1416, %v1417
    %v1419 = vsel %vm1376, %v44, -inf
    %v1420 = vrot.slane %v1419, 4
    %v1421 = vmax.f32 %v1419, %v1420
    %v1422 = vrot.slane %v1421, 2
    %v1423 = vmax.f32 %v1421, %v1422
    %v1424 = vrot.slane %v1423, 1
    %v1425 = vmax.f32 %v1423, %v1424
    %v1426 = vsel %vm1376, %v46, -inf
    %v1427 = vrot.slane %v1426, 4
    %v1428 = vmax.f32 %v1426, %v1427
    %v1429 = vrot.slane %v1428, 2
    %v1430 = vmax.f32 %v1428, %v1429
    %v1431 = vrot.slane %v1430, 1
    %v1432 = vmax.f32 %v1430, %v1431
    %v1433 = vsel %vm1376, %v48, -inf
    %v1434 = vrot.slane %v1433, 4
    %v1435 = vmax.f32 %v1433, %v1434
    %v1436 = vrot.slane %v1435, 2
    %v1437 = vmax.f32 %v1435, %v1436
    %v1438 = vrot.slane %v1437, 1
    %v1439 = vmax.f32 %v1437, %v1438
    %v1440 = vsel %vm1376, %v50, -inf
    %v1441 = vrot.slane %v1440, 4
    %v1442 = vmax.f32 %v1440, %v1441
    %v1443 = vrot.slane %v1442, 2
    %v1444 = vmax.f32 %v1442, %v1443
    %v1445 = vrot.slane %v1444, 1
    %v1446 = vmax.f32 %v1444, %v1445
    %v1447 = vsel %vm1376, %v52, -inf
    %v1448 = vrot.slane %v1447, 4
    %v1449 = vmax.f32 %v1447, %v1448
    %v1450 = vrot.slane %v1449, 2
    %v1451 = vmax.f32 %v1449, %v1450
    %v1452 = vrot.slane %v1451, 1
    %v1453 = vmax.f32 %v1451, %v1452
    %v1454 = vsel %vm1376, %v54, -inf
    %v1455 = vrot.slane %v1454, 4
    %v1456 = vmax.f32 %v1454, %v1455
    %v1457 = vrot.slane %v1456, 2
    %v1458 = vmax.f32 %v1456, %v1457
    %v1459 = vrot.slane %v1458, 1
    %v1460 = vmax.f32 %v1458, %v1459
    %v1461 = vsel %vm1376, %v56, -inf
    %v1462 = vrot.slane %v1461, 4
    %v1463 = vmax.f32 %v1461, %v1462
    %v1464 = vrot.slane %v1463, 2
    %v1465 = vmax.f32 %v1463, %v1464
    %v1466 = vrot.slane %v1465, 1
    %v1467 = vmax.f32 %v1465, %v1466
    %v1468 = vsel %vm1376, %v58, -inf
    %v1469 = vrot.slane %v1468, 4
    %v1470 = vmax.f32 %v1468, %v1469
    %v1471 = vrot.slane %v1470, 2
    %v1472 = vmax.f32 %v1470, %v1471
    %v1473 = vrot.slane %v1472, 1
    %v1474 = vmax.f32 %v1472, %v1473
    %v1475 = vsel %vm1376, %v60, -inf
    %v1476 = vrot.slane %v1475, 4
    %v1477 = vmax.f32 %v1475, %v1476
    %v1478 = vrot.slane %v1477, 2
    %v1479 = vmax.f32 %v1477, %v1478
    %v1480 = vrot.slane %v1479, 1
    %v1481 = vmax.f32 %v1479, %v1480
    %v1482 = vsel %vm1376, %v62, -inf
    %v1483 = vrot.slane %v1482, 4
    %v1484 = vmax.f32 %v1482, %v1483
    %v1485 = vrot.slane %v1484, 2
    %v1486 = vmax.f32 %v1484, %v1485
    %v1487 = vrot.slane %v1486, 1
    %v1488 = vmax.f32 %v1486, %v1487
    %v1489 = vsel %vm541, %v32, -inf
    %v1490 = vsel %vm273, %v33, -inf
    %v1491 = vmax.f32 %v1489, %v1490
    %v1492 = vrot.slane %v1491, 4
    %v1493 = vmax.f32 %v1491, %v1492
    %v1494 = vrot.slane %v1493, 2
    %v1495 = vmax.f32 %v1493, %v1494
    %v1496 = vrot.slane %v1495, 1
    %v1497 = vmax.f32 %v1495, %v1496
    %v1498 = vsel %vm541, %v34, -inf
    %v1499 = vsel %vm273, %v35, -inf
    %v1500 = vmax.f32 %v1498, %v1499
    %v1501 = vrot.slane %v1500, 4
    %v1502 = vmax.f32 %v1500, %v1501
    %v1503 = vrot.slane %v1502, 2
    %v1504 = vmax.f32 %v1502, %v1503
    %v1505 = vrot.slane %v1504, 1
    %v1506 = vmax.f32 %v1504, %v1505
    %v1507 = vsel %vm541, %v36, -inf
    %v1508 = vsel %vm273, %v37, -inf
    %v1509 = vmax.f32 %v1507, %v1508
    %v1510 = vrot.slane %v1509, 4
    %v1511 = vmax.f32 %v1509, %v1510
    %v1512 = vrot.slane %v1511, 2
    %v1513 = vmax.f32 %v1511, %v1512
    %v1514 = vrot.slane %v1513, 1
    %v1515 = vmax.f32 %v1513, %v1514
    %v1516 = vsel %vm541, %v38, -inf
    %v1517 = vsel %vm273, %v39, -inf
    %v1518 = vmax.f32 %v1516, %v1517
    %v1519 = vrot.slane %v1518, 4
    %v1520 = vmax.f32 %v1518, %v1519
    %v1521 = vrot.slane %v1520, 2
    %v1522 = vmax.f32 %v1520, %v1521
    %v1523 = vrot.slane %v1522, 1
    %v1524 = vmax.f32 %v1522, %v1523
    %v1525 = vsel %vm541, %v40, -inf
    %v1526 = vsel %vm273, %v41, -inf
    %v1527 = vmax.f32 %v1525, %v1526
    %v1528 = vrot.slane %v1527, 4
    %v1529 = vmax.f32 %v1527, %v1528
    %v1530 = vrot.slane %v1529, 2
    %v1531 = vmax.f32 %v1529, %v1530
    %v1532 = vrot.slane %v1531, 1
    %v1533 = vmax.f32 %v1531, %v1532
    %v1534 = vsel %vm541, %v42, -inf
    %v1535 = vsel %vm273, %v43, -inf
    %v1536 = vmax.f32 %v1534, %v1535
    %v1537 = vrot.slane %v1536, 4
    %v1538 = vmax.f32 %v1536, %v1537
    %v1539 = vrot.slane %v1538, 2
    %v1540 = vmax.f32 %v1538, %v1539
    %v1541 = vrot.slane %v1540, 1
    %v1542 = vmax.f32 %v1540, %v1541
    %v1543 = vsel %vm541, %v44, -inf
    %v1544 = vsel %vm273, %v45, -inf
    %v1545 = vmax.f32 %v1543, %v1544
    %v1546 = vrot.slane %v1545, 4
    %v1547 = vmax.f32 %v1545, %v1546
    %v1548 = vrot.slane %v1547, 2
    %v1549 = vmax.f32 %v1547, %v1548
    %v1550 = vrot.slane %v1549, 1
    %v1551 = vmax.f32 %v1549, %v1550
    %v1552 = vsel %vm541, %v46, -inf
    %v1553 = vsel %vm273, %v47, -inf
    %v1554 = vmax.f32 %v1552, %v1553
    %v1555 = vrot.slane %v1554, 4
    %v1556 = vmax.f32 %v1554, %v1555
    %v1557 = vrot.slane %v1556, 2
    %v1558 = vmax.f32 %v1556, %v1557
    %v1559 = vrot.slane %v1558, 1
    %v1560 = vmax.f32 %v1558, %v1559
    %v1561 = vsel %vm541, %v48, -inf
    %v1562 = vsel %vm273, %v49, -inf
    %v1563 = vmax.f32 %v1561, %v1562
    %v1564 = vrot.slane %v1563, 4
    %v1565 = vmax.f32 %v1563, %v1564
    %v1566 = vrot.slane %v1565, 2
    %v1567 = vmax.f32 %v1565, %v1566
    %v1568 = vrot.slane %v1567, 1
    %v1569 = vmax.f32 %v1567, %v1568
    %v1570 = vsel %vm541, %v50, -inf
    %v1571 = vsel %vm273, %v51, -inf
    %v1572 = vmax.f32 %v1570, %v1571
    %v1573 = vrot.slane %v1572, 4
    %v1574 = vmax.f32 %v1572, %v1573
    %v1575 = vrot.slane %v1574, 2
    %v1576 = vmax.f32 %v1574, %v1575
    %v1577 = vrot.slane %v1576, 1
    %v1578 = vmax.f32 %v1576, %v1577
    %v1579 = vsel %vm541, %v52, -inf
    %v1580 = vsel %vm273, %v53, -inf
    %v1581 = vmax.f32 %v1579, %v1580
    %v1582 = vrot.slane %v1581, 4
    %v1583 = vmax.f32 %v1581, %v1582
    %v1584 = vrot.slane %v1583, 2
    %v1585 = vmax.f32 %v1583, %v1584
    %v1586 = vrot.slane %v1585, 1
    %v1587 = vmax.f32 %v1585, %v1586
    %v1588 = vsel %vm541, %v54, -inf
    %v1589 = vsel %vm273, %v55, -inf
    %v1590 = vmax.f32 %v1588, %v1589
    %v1591 = vrot.slane %v1590, 4
    %v1592 = vmax.f32 %v1590, %v1591
    %v1593 = vrot.slane %v1592, 2
    %v1594 = vmax.f32 %v1592, %v1593
    %v1595 = vrot.slane %v1594, 1
    %v1596 = vmax.f32 %v1594, %v1595
    %v1597 = vsel %vm541, %v56, -inf
    %v1598 = vsel %vm273, %v57, -inf
    %v1599 = vmax.f32 %v1597, %v1598
    %v1600 = vrot.slane %v1599, 4
    %v1601 = vmax.f32 %v1599, %v1600
    %v1602 = vrot.slane %v1601, 2
    %v1603 = vmax.f32 %v1601, %v1602
    %v1604 = vrot.slane %v1603, 1
    %v1605 = vmax.f32 %v1603, %v1604
    %v1606 = vsel %vm541, %v58, -inf
    %v1607 = vsel %vm273, %v59, -inf
    %v1608 = vmax.f32 %v1606, %v1607
    %v1609 = vrot.slane %v1608, 4
    %v1610 = vmax.f32 %v1608, %v1609
    %v1611 = vrot.slane %v1610, 2
    %v1612 = vmax.f32 %v1610, %v1611
    %v1613 = vrot.slane %v1612, 1
    %v1614 = vmax.f32 %v1612, %v1613
    %v1615 = vsel %vm541, %v60, -inf
    %v1616 = vsel %vm273, %v61, -inf
    %v1617 = vmax.f32 %v1615, %v1616
    %v1618 = vrot.slane %v1617, 4
    %v1619 = vmax.f32 %v1617, %v1618
    %v1620 = vrot.slane %v1619, 2
    %v1621 = vmax.f32 %v1619, %v1620
    %v1622 = vrot.slane %v1621, 1
    %v1623 = vmax.f32 %v1621, %v1622
    %v1624 = vsel %vm541, %v62, -inf
    %v1625 = vsel %vm273, %v63, -inf
    %v1626 = vmax.f32 %v1624, %v1625
    %v1627 = vrot.slane %v1626, 4
    %v1628 = vmax.f32 %v1626, %v1627
    %v1629 = vrot.slane %v1628, 2
    %v1630 = vmax.f32 %v1628, %v1629
    %v1631 = vrot.slane %v1630, 1
    %v1632 = vmax.f32 %v1630, %v1631
    %vm1633 = vcmask 1047554
    %v1634 = vsel %vm1633, %v33, -inf
    %v1635 = vrot.slane %v1634, 4
    %v1636 = vmax.f32 %v1634, %v1635
    %v1637 = vrot.slane %v1636, 2
    %v1638 = vmax.f32 %v1636, %v1637
    %v1639 = vrot.slane %v1638, 1
    %v1640 = vmax.f32 %v1638, %v1639
    %v1641 = vsel %vm1633, %v35, -inf
    %v1642 = vrot.slane %v1641, 4
    %v1643 = vmax.f32 %v1641, %v1642
    %v1644 = vrot.slane %v1643, 2
    %v1645 = vmax.f32 %v1643, %v1644
    %v1646 = vrot.slane %v1645, 1
    %v1647 = vmax.f32 %v1645, %v1646
    %v1648 = vsel %vm1633, %v37, -inf
    %v1649 = vrot.slane %v1648, 4
    %v1650 = vmax.f32 %v1648, %v1649
    %v1651 = vrot.slane %v1650, 2
    %v1652 = vmax.f32 %v1650, %v1651
    %v1653 = vrot.slane %v1652, 1
    %v1654 = vmax.f32 %v1652, %v1653
    %v1655 = vsel %vm1633, %v39, -inf
    %v1656 = vrot.slane %v1655, 4
    %v1657 = vmax.f32 %v1655, %v1656
    %v1658 = vrot.slane %v1657, 2
    %v1659 = vmax.f32 %v1657, %v1658
    %v1660 = vrot.slane %v1659, 1
    %v1661 = vmax.f32 %v1659, %v1660
    %v1662 = vsel %vm1633, %v41, -inf
    %v1663 = vrot.slane %v1662, 4
    %v1664 = vmax.f32 %v1662, %v1663
    %v1665 = vrot.slane %v1664, 2
    %v1666 = vmax.f32 %v1664, %v1665
    %v1667 = vrot.slane %v1666, 1
    %v1668 = vmax.f32 %v1666, %v1667
    %v1669 = vsel %vm1633, %v43, -inf
    %v1670 = vrot.slane %v1669, 4
    %v1671 = vmax.f32 %v1669, %v1670
    %v1672 = vrot.slane %v1671, 2
    %v1673 = vmax.f32 %v1671, %v1672
    %v1674 = vrot.slane %v1673, 1
    %v1675 = vmax.f32 %v1673, %v1674
    %v1676 = vsel %vm1633, %v45, -inf
    %v1677 = vrot.slane %v1676, 4
    %v1678 = vmax.f32 %v1676, %v1677
    %v1679 = vrot.slane %v1678, 2
    %v1680 = vmax.f32 %v1678, %v1679
    %v1681 = vrot.slane %v1680, 1
    %v1682 = vmax.f32 %v1680, %v1681
    %v1683 = vsel %vm1633, %v47, -inf
    %v1684 = vrot.slane %v1683, 4
    %v1685 = vmax.f32 %v1683, %v1684
    %v1686 = vrot.slane %v1685, 2
    %v1687 = vmax.f32 %v1685, %v1686
    %v1688 = vrot.slane %v1687, 1
    %v1689 = vmax.f32 %v1687, %v1688
    %v1690 = vsel %vm1633, %v49, -inf
    %v1691 = vrot.slane %v1690, 4
    %v1692 = vmax.f32 %v1690, %v1691
    %v1693 = vrot.slane %v1692, 2
    %v1694 = vmax.f32 %v1692, %v1693
    %v1695 = vrot.slane %v1694, 1
    %v1696 = vmax.f32 %v1694, %v1695
    %v1697 = vsel %vm1633, %v51, -inf
    %v1698 = vrot.slane %v1697, 4
    %v1699 = vmax.f32 %v1697, %v1698
    %v1700 = vrot.slane %v1699, 2
    %v1701 = vmax.f32 %v1699, %v1700
    %v1702 = vrot.slane %v1701, 1
    %v1703 = vmax.f32 %v1701, %v1702
    %v1704 = vsel %vm1633, %v53, -inf
    %v1705 = vrot.slane %v1704, 4
    %v1706 = vmax.f32 %v1704, %v1705
    %v1707 = vrot.slane %v1706, 2
    %v1708 = vmax.f32 %v1706, %v1707
    %v1709 = vrot.slane %v1708, 1
    %v1710 = vmax.f32 %v1708, %v1709
    %v1711 = vsel %vm1633, %v55, -inf
    %v1712 = vrot.slane %v1711, 4
    %v1713 = vmax.f32 %v1711, %v1712
    %v1714 = vrot.slane %v1713, 2
    %v1715 = vmax.f32 %v1713, %v1714
    %v1716 = vrot.slane %v1715, 1
    %v1717 = vmax.f32 %v1715, %v1716
    %v1718 = vsel %vm1633, %v57, -inf
    %v1719 = vrot.slane %v1718, 4
    %v1720 = vmax.f32 %v1718, %v1719
    %v1721 = vrot.slane %v1720, 2
    %v1722 = vmax.f32 %v1720, %v1721
    %v1723 = vrot.slane %v1722, 1
    %v1724 = vmax.f32 %v1722, %v1723
    %v1725 = vsel %vm1633, %v59, -inf
    %v1726 = vrot.slane %v1725, 4
    %v1727 = vmax.f32 %v1725, %v1726
    %v1728 = vrot.slane %v1727, 2
    %v1729 = vmax.f32 %v1727, %v1728
    %v1730 = vrot.slane %v1729, 1
    %v1731 = vmax.f32 %v1729, %v1730
    %v1732 = vsel %vm1633, %v61, -inf
    %v1733 = vrot.slane %v1732, 4
    %v1734 = vmax.f32 %v1732, %v1733
    %v1735 = vrot.slane %v1734, 2
    %v1736 = vmax.f32 %v1734, %v1735
    %v1737 = vrot.slane %v1736, 1
    %v1738 = vmax.f32 %v1736, %v1737
    %v1739 = vsel %vm1633, %v63, -inf
    %v1740 = vrot.slane %v1739, 4
    %v1741 = vmax.f32 %v1739, %v1740
    %v1742 = vrot.slane %v1741, 2
    %v1743 = vmax.f32 %v1741, %v1742
    %v1744 = vrot.slane %v1743, 1
    %v1745 = vmax.f32 %v1743, %v1744
    %v1794 = vrot.slane %v1390, 7
    %v1795 = vsel %vm1117, %v1794, %v1383
    %v1796 = vrot.slane %v1397, 6
    %v1797 = vsel %vm1120, %v1796, %v1795
    %v1798 = vrot.slane %v1404, 5
    %v1799 = vsel %vm1123, %v1798, %v1797
    %v1800 = vrot.slane %v1411, 4
    %v1801 = vsel %vm1126, %v1800, %v1799
    %v1802 = vrot.slane %v1418, 3
    %v1803 = vsel %vm1129, %v1802, %v1801
    %v1804 = vrot.slane %v1425, 2
    %v1805 = vsel %vm1132, %v1804, %v1803
    %v1806 = vrot.slane %v1432, 1
    %vm1807 = vcmask 1047559
    %v1808 = vsel %vm1807, %v1806, %v1805
    %v1809 = vrot.slane %v1446, 7
    %v1810 = vsel %vm1117, %v1809, %v1439
    %v1811 = vrot.slane %v1453, 6
    %v1812 = vsel %vm1120, %v1811, %v1810
    %v1813 = vrot.slane %v1460, 5
    %v1814 = vsel %vm1123, %v1813, %v1812
    %v1815 = vrot.slane %v1467, 4
    %v1816 = vsel %vm1126, %v1815, %v1814
    %v1817 = vrot.slane %v1474, 3
    %v1818 = vsel %vm1129, %v1817, %v1816
    %v1819 = vrot.slane %v1481, 2
    %v1820 = vsel %vm1132, %v1819, %v1818
    %v1821 = vrot.slane %v1488, 1
    %v1822 = vsel %vm1807, %v1821, %v1820
    %v1823 = vrot.slane %v1506, 7
    %v1824 = vsel %vm1117, %v1823, %v1497
    %v1825 = vrot.slane %v1515, 6
    %v1826 = vsel %vm1120, %v1825, %v1824
    %v1827 = vrot.slane %v1524, 5
    %v1828 = vsel %vm1123, %v1827, %v1826
    %v1829 = vrot.slane %v1533, 4
    %v1830 = vsel %vm1126, %v1829, %v1828
    %v1831 = vrot.slane %v1542, 3
    %v1832 = vsel %vm1129, %v1831, %v1830
    %v1833 = vrot.slane %v1551, 2
    %v1834 = vsel %vm1132, %v1833, %v1832
    %v1835 = vrot.slane %v1560, 1
    %v1836 = vsel %vm1807, %v1835, %v1834
    %v1837 = vrot.slane %v1578, 7
    %v1838 = vsel %vm1117, %v1837, %v1569
    %v1839 = vrot.slane %v1587, 6
    %v1840 = vsel %vm1120, %v1839, %v1838
    %v1841 = vrot.slane %v1596, 5
    %v1842 = vsel %vm1123, %v1841, %v1840
    %v1843 = vrot.slane %v1605, 4
    %v1844 = vsel %vm1126, %v1843, %v1842
    %v1845 = vrot.slane %v1614, 3
    %v1846 = vsel %vm1129, %v1845, %v1844
    %v1847 = vrot.slane %v1623, 2
    %v1848 = vsel %vm1132, %v1847, %v1846
    %v1849 = vrot.slane %v1632, 1
    %v1850 = vsel %vm1807, %v1849, %v1848
    %v1851 = vrot.slane %v1647, 7
    %v1852 = vsel %vm1117, %v1851, %v1640
    %v1853 = vrot.slane %v1654, 6
    %v1854 = vsel %vm1120, %v1853, %v1852
    %v1855 = vrot.slane %v1661, 5
    %v1856 = vsel %vm1123, %v1855, %v1854
    %v1857 = vrot.slane %v1668, 4
    %v1858 = vsel %vm1126, %v1857, %v1856
    %v1859 = vrot.slane %v1675, 3
    %v1860 = vsel %vm1129, %v1859, %v1858
    %v1861 = vrot.slane %v1682, 2
    %v1862 = vsel %vm1132, %v1861, %v1860
    %v1863 = vrot.slane %v1689, 1
    %v1864 = vsel %vm1807, %v1863, %v1862
    %v1865 = vrot.slane %v1703, 7
    %v1866 = vsel %vm1117, %v1865, %v1696
    %v1867 = vrot.slane %v1710, 6
    %v1868 = vsel %vm1120, %v1867, %v1866
    %v1869 = vrot.slane %v1717, 5
    %v1870 = vsel %vm1123, %v1869, %v1868
    %v1871 = vrot.slane %v1724, 4
    %v1872 = vsel %vm1126, %v1871, %v1870
    %v1873 = vrot.slane %v1731, 3
    %v1874 = vsel %vm1129, %v1873, %v1872
    %v1875 = vrot.slane %v1738, 2
    %v1876 = vsel %vm1132, %v1875, %v1874
    %v1877 = vrot.slane %v1745, 1
    %v1878 = vsel %vm1807, %v1877, %v1876
    %1885 = vst [vmem:[#allocation9] sm:$0xff] %v1808
    %1886 = vst [vmem:[#allocation9 + $0x8] sm:$0xff] %v1822
    %1887 = vst [vmem:[#allocation9 + $0x10] sm:$0xff] %v1836
    %1888 = vst [vmem:[#allocation9 + $0x18] sm:$0xff] %v1850
    %1889 = vst [vmem:[#allocation9 + $0x20] sm:$0xff] %v1864
    %1890 = vst [vmem:[#allocation9 + $0x28] sm:$0xff] %v1878
    %v1891 = vmax.f32 %v34, %v38
    %v1892 = vmax.f32 %v67, %v40
    %v1893 = vmax.f32 %v1891, %v42
    %v1894 = vmax.f32 %v1892, %v44
    %v1895 = vmax.f32 %v1893, %v46
    %v1896 = vmax.f32 %v1894, %v1895
    %v1897 = vmax.f32 %v35, %v39
    %v1898 = vmax.f32 %v69, %v41
    %v1899 = vmax.f32 %v1897, %v43
    %v1900 = vmax.f32 %v1898, %v45
    %v1901 = vmax.f32 %v1899, %v47
    %v1902 = vmax.f32 %v1900, %v1901
    %vm1903 = vcmp.eq.f32.partialorder %v32, %v1896
    %vm1904 = vcmp.eq.f32.partialorder %v33, %v1902
    %vm1905 = vcmp.eq.f32.partialorder %v34, %v1896
    %vm1906 = vcmp.eq.f32.partialorder %v35, %v1902
    %vm1907 = vcmp.eq.f32.partialorder %v36, %v1896
    %vm1908 = vcmp.eq.f32.partialorder %v37, %v1902
    %vm1909 = vcmp.eq.f32.partialorder %v38, %v1896
    %vm1910 = vcmp.eq.f32.partialorder %v39, %v1902
    %vm1911 = vcmp.eq.f32.partialorder %v40, %v1896
    %vm1912 = vcmp.eq.f32.partialorder %v41, %v1902
    %vm1913 = vcmp.eq.f32.partialorder %v42, %v1896
    %vm1914 = vcmp.eq.f32.partialorder %v43, %v1902
    %vm1915 = vcmp.eq.f32.partialorder %v44, %v1896
    %vm1916 = vcmp.eq.f32.partialorder %v45, %v1902
    %vm1917 = vcmp.eq.f32.partialorder %v46, %v1896
    %vm1918 = vcmp.eq.f32.partialorder %v47, %v1902
    %v1919 = vsel %vm1903, 0, 256
    %v1920 = vsel %vm1904, 0, 256
    %v1921 = vsel %vm1905, 1, 256
    %v1922 = vsel %vm1906, 1, 256
    %v1923 = vsel %vm1907, 2, 256
    %v1924 = vsel %vm1908, 2, 256
    %v1925 = vsel %vm1909, 3, 256
    %v1926 = vsel %vm1910, 3, 256
    %v1927 = vsel %vm1911, 4, 256
    %v1928 = vsel %vm1912, 4, 256
    %v1929 = vsel %vm1913, 5, 256
    %v1930 = vsel %vm1914, 5, 256
    %v1931 = vsel %vm1915, 6, 256
    %v1932 = vsel %vm1916, 6, 256
    %v1933 = vsel %vm1917, 7, 256
    %v1934 = vsel %vm1918, 7, 256
    %vm1935 = vcmp.lt.s32.totalorder %v1919, %v1923
    %v1936 = vsel %vm1935, %v1919, %v1923
    %vm1937 = vcmp.lt.s32.totalorder %v1921, %v1925
    %v1938 = vsel %vm1937, %v1921, %v1925
    %vm1939 = vcmp.lt.s32.totalorder %v1936, %v1927
    %v1940 = vsel %vm1939, %v1936, %v1927
    %vm1941 = vcmp.lt.s32.totalorder %v1938, %v1929
    %v1942 = vsel %vm1941, %v1938, %v1929
    %vm1943 = vcmp.lt.s32.totalorder %v1940, %v1931
    %v1944 = vsel %vm1943, %v1940, %v1931
    %vm1945 = vcmp.lt.s32.totalorder %v1942, %v1933
    %v1946 = vsel %vm1945, %v1942, %v1933
    %vm1947 = vcmp.lt.s32.totalorder %v1944, %v1946
    %v1948 = vsel %vm1947, %v1944, %v1946
    %vm1949 = vcmp.lt.s32.totalorder %v1920, %v1924
    %v1950 = vsel %vm1949, %v1920, %v1924
    %vm1951 = vcmp.lt.s32.totalorder %v1922, %v1926
    %v1952 = vsel %vm1951, %v1922, %v1926
    %vm1953 = vcmp.lt.s32.totalorder %v1950, %v1928
    %v1954 = vsel %vm1953, %v1950, %v1928
    %vm1955 = vcmp.lt.s32.totalorder %v1952, %v1930
    %v1956 = vsel %vm1955, %v1952, %v1930
    %vm1957 = vcmp.lt.s32.totalorder %v1954, %v1932
    %v1958 = vsel %vm1957, %v1954, %v1932
    %vm1959 = vcmp.lt.s32.totalorder %v1956, %v1934
    %v1960 = vsel %vm1959, %v1956, %v1934
    %vm1961 = vcmp.lt.s32.totalorder %v1958, %v1960
    %v1962 = vsel %vm1961, %v1958, %v1960
    %v1963 = vmul.u32 %v1948, 16
    %v1964 = vmul.u32 %v1962, 16
    %v1965 = vadd.s32 %v1963, %v65
    %v1966 = vadd.s32 %v1964, %v66
    %v1967 = vmax.f32 %v48, %v52
    %v1968 = vmax.f32 %v1967, %v56
    %v1969 = vmax.f32 %v173, %v58
    %v1970 = vmax.f32 %v1968, %v60
    %v1971 = vmax.f32 %v1969, %v62
    %v1972 = vmax.f32 %v1970, %v1971
    %v1973 = vmax.f32 %v49, %v53
    %v1974 = vmax.f32 %v1973, %v57
    %v1975 = vmax.f32 %v175, %v59
    %v1976 = vmax.f32 %v1974, %v61
    %v1977 = vmax.f32 %v1975, %v63
    %v1978 = vmax.f32 %v1976, %v1977
    %vm1979 = vcmp.eq.f32.partialorder %v48, %v1972
    %vm1980 = vcmp.eq.f32.partialorder %v49, %v1978
    %vm1981 = vcmp.eq.f32.partialorder %v50, %v1972
    %vm1982 = vcmp.eq.f32.partialorder %v51, %v1978
    %vm1983 = vcmp.eq.f32.partialorder %v52, %v1972
    %vm1984 = vcmp.eq.f32.partialorder %v53, %v1978
    %vm1985 = vcmp.eq.f32.partialorder %v54, %v1972
    %vm1986 = vcmp.eq.f32.partialorder %v55, %v1978
    %vm1987 = vcmp.eq.f32.partialorder %v56, %v1972
    %vm1988 = vcmp.eq.f32.partialorder %v57, %v1978
    %vm1989 = vcmp.eq.f32.partialorder %v58, %v1972
    %vm1990 = vcmp.eq.f32.partialorder %v59, %v1978
    %vm1991 = vcmp.eq.f32.partialorder %v60, %v1972
    %vm1992 = vcmp.eq.f32.partialorder %v61, %v1978
    %vm1993 = vcmp.eq.f32.partialorder %v62, %v1972
    %vm1994 = vcmp.eq.f32.partialorder %v63, %v1978
    %v1995 = vsel %vm1979, 8, 256
    %v1996 = vsel %vm1980, 8, 256
    %v1997 = vsel %vm1981, 9, 256
    %v1998 = vsel %vm1982, 9, 256
    %v1999 = vsel %vm1983, 10, 256
    %v2000 = vsel %vm1984, 10, 256
    %v2001 = vsel %vm1985, 11, 256
    %v2002 = vsel %vm1986, 11, 256
    %v2003 = vsel %vm1987, 12, 256
    %v2004 = vsel %vm1988, 12, 256
    %v2005 = vsel %vm1989, 13, 256
    %v2006 = vsel %vm1990, 13, 256
    %v2007 = vsel %vm1991, 14, 256
    %v2008 = vsel %vm1992, 14, 256
    %v2009 = vsel %vm1993, 15, 256
    %v2010 = vsel %vm1994, 15, 256
    %vm2011 = vcmp.lt.s32.totalorder %v1995, %v1999
    %v2012 = vsel %vm2011, %v1995, %v1999
    %vm2013 = vcmp.lt.s32.totalorder %v1997, %v2001
    %v2014 = vsel %vm2013, %v1997, %v2001
    %vm2015 = vcmp.lt.s32.totalorder %v2012, %v2003
    %v2016 = vsel %vm2015, %v2012, %v2003
    %vm2017 = vcmp.lt.s32.totalorder %v2014, %v2005
    %v2018 = vsel %vm2017, %v2014, %v2005
    %vm2019 = vcmp.lt.s32.totalorder %v2016, %v2007
    %v2020 = vsel %vm2019, %v2016, %v2007
    %vm2021 = vcmp.lt.s32.totalorder %v2018, %v2009
    %v2022 = vsel %vm2021, %v2018, %v2009
    %vm2023 = vcmp.lt.s32.totalorder %v2020, %v2022
    %v2024 = vsel %vm2023, %v2020, %v2022
    %vm2025 = vcmp.lt.s32.totalorder %v1996, %v2000
    %v2026 = vsel %vm2025, %v1996, %v2000
    %vm2027 = vcmp.lt.s32.totalorder %v1998, %v2002
    %v2028 = vsel %vm2027, %v1998, %v2002
    %vm2029 = vcmp.lt.s32.totalorder %v2026, %v2004
    %v2030 = vsel %vm2029, %v2026, %v2004
    %vm2031 = vcmp.lt.s32.totalorder %v2028, %v2006
    %v2032 = vsel %vm2031, %v2028, %v2006
    %vm2033 = vcmp.lt.s32.totalorder %v2030, %v2008
    %v2034 = vsel %vm2033, %v2030, %v2008
    %vm2035 = vcmp.lt.s32.totalorder %v2032, %v2010
    %v2036 = vsel %vm2035, %v2032, %v2010
    %vm2037 = vcmp.lt.s32.totalorder %v2034, %v2036
    %v2038 = vsel %vm2037, %v2034, %v2036
    %v2039 = vmul.u32 %v2024, 16
    %v2040 = vmul.u32 %v2038, 16
    %v2041 = vadd.s32 %v2039, %v65
    %v2042 = vadd.s32 %v2040, %v66
    %2043 = vst [vmem:[#allocation11] sm:$0xff] %v1896
    %2044 = vst [vmem:[#allocation11 + $0x8] sm:$0xff] %v1902
    %2045 = vst [vmem:[#allocation11 + $0x10] sm:$0xff] %v1972
    %2046 = vst [vmem:[#allocation11 + $0x18] sm:$0xff] %v1978
    %2047 = vst [vmem:[#allocation12] sm:$0xff] %v1965
    %2048 = vst [vmem:[#allocation12 + $0x8] sm:$0xff] %v1966
    %2049 = vst [vmem:[#allocation12 + $0x10] sm:$0xff] %v2041
    %2050 = vst [vmem:[#allocation12 + $0x18] sm:$0xff] %v2042
    // Predicated region
    $region10: #{tpu_custom_call.1} parent=1 // pred_check
      _
    $region11: #{tpu_custom_call.1} parent=1 // pred_check_branch
      %2052 = sbr.rel (0) target = $region13
    $region12: #{tpu_custom_call.1} parent=1 // pred_region
      %s2054 = ssub.s32 768, 768
      %2055 = vsyncadd [#allocation4], %s2054
      %s2056 = sshll.u32 [#allocation5], 4
      %s2057 = int_to_ptr.vmem [resolvable:$true] %s2056
      %2062 = dma.vmem_to_hbm [thread:$0]  %s2057, 768, %s1, [#allocation4], 128, 128, 8
    $region13: #{tpu_custom_call.1} parent=1 // pred_fallthru
      _
    // Predicated region
    $region14: #{tpu_custom_call.1} parent=1 // pred_check
      _
    $region15: #{tpu_custom_call.1} parent=1 // pred_check_branch
      %2064 = sbr.rel (0) target = $region17
    $region16: #{tpu_custom_call.1} parent=1 // pred_region
      %s2066 = ssub.s32 768, 768
      %2067 = vsyncadd [#allocation7], %s2066
      %s2068 = sshll.u32 [#allocation6], 4
      %s2069 = int_to_ptr.vmem [resolvable:$true] %s2068
      %2074 = dma.vmem_to_hbm [thread:$0]  %s2069, 768, %s2, [#allocation7], 128, 128, 8
    $region17: #{tpu_custom_call.1} parent=1 // pred_fallthru
      _
    // Predicated region
    $region18: #{tpu_custom_call.1} parent=1 // pred_check
      _
    $region19: #{tpu_custom_call.1} parent=1 // pred_check_branch
      %2076 = sbr.rel (0) target = $region21
    $region20: #{tpu_custom_call.1} parent=1 // pred_region
      %s2078 = ssub.s32 16, 16
      %2079 = vsyncadd [#allocation7], %s2078
      %s2081 = sshll.u32 [#allocation8], 4
      %s2082 = int_to_ptr.vmem [resolvable:$true] %s2081
      %2084 = dma.vmem_to_hbm [thread:$0]  %s2082, 16, %s3, [#allocation7]
    $region21: #{tpu_custom_call.1} parent=1 // pred_fallthru
      _
    // Predicated region
    $region22: #{tpu_custom_call.1} parent=1 // pred_check
      _
    $region23: #{tpu_custom_call.1} parent=1 // pred_check_branch
      %2086 = sbr.rel (0) target = $region25
    $region24: #{tpu_custom_call.1} parent=1 // pred_region
      %s2088 = ssub.s32 768, 768
      %2089 = vsyncadd [#allocation10], %s2088
      %s2090 = sshll.u32 [#allocation9], 4
      %s2091 = int_to_ptr.vmem [resolvable:$true] %s2090
      %2096 = dma.vmem_to_hbm [thread:$0]  %s2091, 768, %s4, [#allocation10], 128, 128, 8
    $region25: #{tpu_custom_call.1} parent=1 // pred_fallthru
      _
    // Predicated region
    $region26: #{tpu_custom_call.1} parent=1 // pred_check
      _
    $region27: #{tpu_custom_call.1} parent=1 // pred_check_branch
      %2098 = sbr.rel (0) target = $region29
    $region28: #{tpu_custom_call.1} parent=1 // pred_region
      %s2100 = ssub.s32 512, 512
      %2101 = vsyncadd [#allocation10], %s2100
      %s2102 = sshll.u32 [#allocation11], 4
      %s2103 = int_to_ptr.vmem [resolvable:$true] %s2102
      %2108 = dma.vmem_to_hbm [thread:$0]  %s2103, 512, %s5, [#allocation10], 128, 128, 8
    $region29: #{tpu_custom_call.1} parent=1 // pred_fallthru
      _
    // Predicated region
    $region30: #{tpu_custom_call.1} parent=1 // pred_check
      _
    $region31: #{tpu_custom_call.1} parent=1 // pred_check_branch
      %2110 = sbr.rel (0) target = $region33
    $region32: #{tpu_custom_call.1} parent=1 // pred_region
      %s2112 = ssub.s32 512, 512
      %2113 = vsyncadd [#allocation13], %s2112
      %s2114 = sshll.u32 [#allocation12], 4
      %s2115 = int_to_ptr.vmem [resolvable:$true] %s2114
      %2120 = dma.vmem_to_hbm [thread:$0]  %s2115, 512, %s6, [#allocation13], 128, 128, 8
    $region33: #{tpu_custom_call.1} parent=1 // pred_fallthru
      _
    // Predicated region
    $region34: #{tpu_custom_call.1} parent=1 // pred_check
      _
    $region35: #{tpu_custom_call.1} parent=1 // pred_check_branch
      %2122 = sbr.rel (0) target = $region37
    $region36: #{tpu_custom_call.1} parent=1 // pred_region
      %2123 = dma.done [#allocation4], 768
    $region37: #{tpu_custom_call.1} parent=1 // pred_fallthru
      _
    // Predicated region
    $region38: #{tpu_custom_call.1} parent=1 // pred_check
      _
    $region39: #{tpu_custom_call.1} parent=1 // pred_check_branch
      %2125 = sbr.rel (0) target = $region41
    $region40: #{tpu_custom_call.1} parent=1 // pred_region
      %2126 = dma.done [#allocation7], 768
    $region41: #{tpu_custom_call.1} parent=1 // pred_fallthru
      _
    // Predicated region
    $region42: #{tpu_custom_call.1} parent=1 // pred_check
      _
    $region43: #{tpu_custom_call.1} parent=1 // pred_check_branch
      %2128 = sbr.rel (0) target = $region45
    $region44: #{tpu_custom_call.1} parent=1 // pred_region
      %2129 = dma.done [#allocation7], 16
    $region45: #{tpu_custom_call.1} parent=1 // pred_fallthru
      _
    // Predicated region
    $region46: #{tpu_custom_call.1} parent=1 // pred_check
      _
    $region47: #{tpu_custom_call.1} parent=1 // pred_check_branch
      %2131 = sbr.rel (0) target = $region49
    $region48: #{tpu_custom_call.1} parent=1 // pred_region
      %2132 = dma.done [#allocation10], 768
    $region49: #{tpu_custom_call.1} parent=1 // pred_fallthru
      _
    // Predicated region
    $region50: #{tpu_custom_call.1} parent=1 // pred_check
      _
    $region51: #{tpu_custom_call.1} parent=1 // pred_check_branch
      %2134 = sbr.rel (0) target = $region53
    $region52: #{tpu_custom_call.1} parent=1 // pred_region
      %2135 = dma.done [#allocation10], 512
    $region53: #{tpu_custom_call.1} parent=1 // pred_fallthru
      _
    // Predicated region
    $region54: #{tpu_custom_call.1} parent=1 // pred_check
      _
    $region55: #{tpu_custom_call.1} parent=1 // pred_check_branch
      %2137 = sbr.rel (0) target = $region57
    $region56: #{tpu_custom_call.1} parent=1 // pred_region
      %2138 = dma.done [#allocation13], 512
    $region57: #{tpu_custom_call.1} parent=1 // pred_fallthru
      _
    %2139 = vsyncpa [#allocation3], 1
    %2140 = vsyncpa [#allocation4], 1
    %2141 = vsyncpa [#allocation7], 1
    %2142 = vsyncpa [#allocation10], 1
    %2143 = vsyncpa [#allocation13], 1

</llo_original>
